<compile_context>
chip_gen: v7x
topology: tpu7x:2x2x1
jax: 0.10.0
libtpu: 0.0.40
codegen_flags: <defaults>
</compile_context>

<pallas_src>
import functools

import jax
import jax.numpy as jnp
from jax.experimental import pallas as pl
from jax.experimental.pallas import tpu as pltpu


def _layer_norm(z, gamma, beta, eps):
    mean = jnp.mean(z, axis=-1, keepdims=True)
    centered = z - mean
    var = jnp.mean(centered * centered, axis=-1, keepdims=True)
    inv = jax.lax.rsqrt(var + eps)
    return centered * inv * gamma + beta


def _encoder_kernel(x_ref, mask_ref, qkv_w_ref, qkv_b_ref,
                    ln1_g_ref, ln1_b_ref,
                    w1_ref, b1_ref, w2_ref, b2_ref,
                    ln2_g_ref, ln2_b_ref,
                    out_ref, scores_ref, mha_ref,
                    *, num_heads: int, eps: float = 1e-5):
    # x_ref:      (Bb*S, E) f32  -- flattened tokens of one batch block
    # mask_ref:   (Bb, 1, S) f32 -- key-position mask (1 = keep, 0 = mask)
    # out_ref:    (Bb*S, E) f32
    # scores_ref: (Bb, H, S, S) f32
    # mha_ref:    (Bb*S, E) f32 VMEM scratch (per-head context assembled here)
    Bb = mask_ref.shape[0]
    S = mask_ref.shape[2]
    E = x_ref.shape[-1]
    H = num_heads
    Dh = E // H
    scale = jnp.float32(1.0 / (Dh ** 0.5))
    bf16 = jnp.bfloat16

    x = x_ref[...]                                       # (T, E) f32

    # ---------------- fused QKV projection over ALL tokens in the block -----
    qkv = jnp.dot(x.astype(bf16), qkv_w_ref[...].astype(bf16),
                  preferred_element_type=jnp.float32) + qkv_b_ref[...]  # (T, 3E)

    # ---------------- attention: static inner loop over batch elements ------
    for b in range(Bb):
        tok = slice(b * S, (b + 1) * S)
        qkv_blk = qkv[tok]                               # (S, 3E)
        # Hoisted mask bias: computed once per batch element, reused by every
        # head (broadcast over query rows).
        neg_bias = jnp.where(mask_ref[b] == 0.0,
                             jnp.float32(-1000.0), jnp.float32(0.0))  # (1, S)
        attn_heads = []
        for h in range(H):
            qh = qkv_blk[:, h * Dh:(h + 1) * Dh] * scale             # (S, Dh)
            kh = qkv_blk[:, E + h * Dh:E + (h + 1) * Dh]             # (S, Dh)
            vh = qkv_blk[:, 2 * E + h * Dh:2 * E + (h + 1) * Dh]     # (S, Dh)
            logits = jax.lax.dot_general(
                qh.astype(bf16), kh.astype(bf16),
                (((1,), (1,)), ((), ())),
                preferred_element_type=jnp.float32) + neg_bias       # (S, S)
            m = jnp.max(logits, axis=-1, keepdims=True)
            p = jnp.exp(logits - m)
            attn = p * pl.reciprocal(jnp.sum(p, axis=-1, keepdims=True),
                                     approx=True)
            attn_heads.append(attn)
            # TODO(synk): attention dropout is eval-mode identity.
            ctx = jnp.dot(attn.astype(bf16), vh.astype(bf16),
                          preferred_element_type=jnp.float32)        # (S, Dh)
            # write head context at its static lane offset (no concatenate)
            mha_ref[tok, h * Dh:(h + 1) * Dh] = ctx
        # single batched writeback of all heads' scores for this batch element
        scores_ref[b] = jnp.stack(attn_heads, axis=0).astype(scores_ref.dtype)

    mha = mha_ref[...]                                   # (T, E)

    # ---------------- residual + mha_norm -----------------------------------
    y1 = _layer_norm(x + mha, ln1_g_ref[...], ln1_b_ref[...], eps)

    # ---------------- MLPResidual: linear1 -> relu -> linear2 ----------------
    h1 = jnp.dot(y1.astype(bf16), w1_ref[...].astype(bf16),
                 preferred_element_type=jnp.float32) + b1_ref[...]
    h1 = jnp.maximum(h1, 0.0)
    mlp = jnp.dot(h1.astype(bf16), w2_ref[...].astype(bf16),
                  preferred_element_type=jnp.float32) + b2_ref[...]
    # TODO(synk): MLP dropout is eval-mode identity.

    # ---------------- residual (from the ORIGINAL input) + mlp_norm ----------
    y2 = _layer_norm(x + mlp, ln2_g_ref[...], ln2_b_ref[...], eps)
    # TODO(synk): encoder dropout is eval-mode identity.

    out_ref[...] = y2.astype(out_ref.dtype)


def _pick_batch_block(B, S):
    """~128 tokens per grid step, but keep >= 2 grid steps when possible."""
    blk = max(1, min(B, max(1, 128 // S)))
    while B % blk:
        blk -= 1
    if B // blk < 2 and blk > 1:
        for cand in range(blk // 2, 0, -1):
            if B % cand == 0:
                blk = cand
                break
    return blk


def encoder_forward(x, attention_mask, params, *, num_heads, batch_block=None):
    """x: (B, S, E) f32; attention_mask: (B, S) (1 = keep, 0 = mask)."""
    B, S, E = x.shape
    FE = params["w1"].shape[1]
    H = num_heads
    Bb = _pick_batch_block(B, S) if batch_block is None else batch_block
    assert B % Bb == 0, "batch_block must divide batch size"
    T = Bb * S

    x_flat = x.reshape(B * S, E)
    mask3 = attention_mask.astype(jnp.float32).reshape(B, 1, S)
    kernel = functools.partial(_encoder_kernel, num_heads=num_heads)

    grid_spec = pltpu.PrefetchScalarGridSpec(
        num_scalar_prefetch=0,
        grid=(B // Bb,),
        in_specs=[
            pl.BlockSpec((T, E), lambda b: (b, 0)),          # x (flat tokens)
            pl.BlockSpec((Bb, 1, S), lambda b: (b, 0, 0)),   # attention mask
            pl.BlockSpec((E, 3 * E), lambda b: (0, 0)),      # qkv weight
            pl.BlockSpec((1, 3 * E), lambda b: (0, 0)),      # qkv bias
            pl.BlockSpec((1, E), lambda b: (0, 0)),          # mha_norm gamma
            pl.BlockSpec((1, E), lambda b: (0, 0)),          # mha_norm beta
            pl.BlockSpec((E, FE), lambda b: (0, 0)),         # linear1 weight
            pl.BlockSpec((1, FE), lambda b: (0, 0)),         # linear1 bias
            pl.BlockSpec((FE, E), lambda b: (0, 0)),         # linear2 weight
            pl.BlockSpec((1, E), lambda b: (0, 0)),          # linear2 bias
            pl.BlockSpec((1, E), lambda b: (0, 0)),          # mlp_norm gamma
            pl.BlockSpec((1, E), lambda b: (0, 0)),          # mlp_norm beta
        ],
        out_specs=[
            pl.BlockSpec((T, E), lambda b: (b, 0)),              # encoder out
            pl.BlockSpec((Bb, H, S, S), lambda b: (b, 0, 0, 0)),  # attn scores
        ],
        scratch_shapes=[pltpu.VMEM((T, E), jnp.float32)],
    )

    out_flat, scores = pl.pallas_call(
        kernel,
        out_shape=(
            jax.ShapeDtypeStruct((B * S, E), jnp.float32),
            jax.ShapeDtypeStruct((B, H, S, S), jnp.float32),
        ),
        grid_spec=grid_spec,
        compiler_params=pltpu.CompilerParams(
            dimension_semantics=("parallel",),
            vmem_limit_bytes=32 * 1024 * 1024),
    )(x_flat, mask3,
      params["qkv_w"], params["qkv_b"],
      params["ln1_g"], params["ln1_b"],
      params["w1"], params["b1"],
      params["w2"], params["b2"],
      params["ln2_g"], params["ln2_b"])
    return out_flat.reshape(B, S, E), scores


def encoder_ref(x, mask, params, *, num_heads):
    """Pure-JAX f32 reference mirroring the PyTorch Encoder (eval mode)."""
    B, S, E = x.shape
    Dh = E // num_heads
    scale = 1.0 / (Dh ** 0.5)

    qkv = x @ params["qkv_w"] + params["qkv_b"]
    q, k, v = qkv[..., :E], qkv[..., E:2 * E], qkv[..., 2 * E:]

    def to_heads(t):
        return t.reshape(B, S, num_heads, Dh).transpose(0, 2, 1, 3)

    qh, kh, vh = to_heads(q), to_heads(k), to_heads(v)
    logits = jnp.einsum("bhsd,bhtd->bhst", qh, kh) * scale
    logits = jnp.where(mask[:, None, None, :] == 0, -1000.0, logits)
    scores = jax.nn.softmax(logits, axis=-1)
    ctx = jnp.einsum("bhst,bhtd->bhsd", scores, vh)
    mha = ctx.transpose(0, 2, 1, 3).reshape(B, S, E)

    def ln(z, g, b):
        mean = z.mean(-1, keepdims=True)
        var = ((z - mean) ** 2).mean(-1, keepdims=True)
        return (z - mean) / jnp.sqrt(var + 1e-5) * g + b

    y1 = ln(x + mha, params["ln1_g"], params["ln1_b"])
    h1 = jax.nn.relu(y1 @ params["w1"] + params["b1"])
    mlp = h1 @ params["w2"] + params["b2"]
    y2 = ln(x + mlp, params["ln2_g"], params["ln2_b"])
    return y2, scores


if __name__ == "__main__":
    B, S, E, H, FWD = 4, 8, 32, 4, 4
    FE = E * FWD

    key = jax.random.PRNGKey(0)
    keys = jax.random.split(key, 12)
    params = {
        "qkv_w": 0.1 * jax.random.normal(keys[0], (E, 3 * E), jnp.float32),
        "qkv_b": 0.1 * jax.random.normal(keys[1], (1, 3 * E), jnp.float32),
        "w1":    0.1 * jax.random.normal(keys[2], (E, FE), jnp.float32),
        "b1":    0.1 * jax.random.normal(keys[3], (1, FE), jnp.float32),
        "w2":    0.1 * jax.random.normal(keys[4], (FE, E), jnp.float32),
        "b2":    0.1 * jax.random.normal(keys[5], (1, E), jnp.float32),
        "ln1_g": 1.0 + 0.1 * jax.random.normal(keys[6], (1, E), jnp.float32),
        "ln1_b": 0.1 * jax.random.normal(keys[7], (1, E), jnp.float32),
        "ln2_g": 1.0 + 0.1 * jax.random.normal(keys[8], (1, E), jnp.float32),
        "ln2_b": 0.1 * jax.random.normal(keys[9], (1, E), jnp.float32),
    }
    x = jax.random.normal(keys[10], (B, S, E), jnp.float32)
    # mask out some key positions on two batch elements
    mask = jnp.ones((B, S), jnp.float32)
    mask = mask.at[1, S - 2:].set(0.0)
    mask = mask.at[3, :3].set(0.0)

    out, scores = encoder_forward(x, mask, params, num_heads=H, batch_block=2)
    out = jax.block_until_ready(out)
    scores = jax.block_until_ready(scores)

    ref_out, ref_scores = encoder_ref(x, mask, params, num_heads=H)

    assert out.shape == (B, S, E)
    assert scores.shape == (B, H, S, S)
    # bf16 matmul operands (f32 accumulate) vs. pure-f32 reference -> loose tol
    assert jnp.allclose(out, ref_out, atol=5e-2, rtol=5e-2), \
        float(jnp.max(jnp.abs(out - ref_out)))
    assert jnp.allclose(scores, ref_scores, atol=2e-2, rtol=2e-2), \
        float(jnp.max(jnp.abs(scores - ref_scores)))

    print("KERNEL_OK")
</pallas_src>

<mosaic_0001>
module attributes {stable_mosaic.version = 11 : i64} {
  func.func @_encoder_kernel(%arg0: i32, %arg1: memref<16x32xf32, #tpu.memory_space<vmem>>, %arg2: memref<2x1x8xf32, #tpu.memory_space<vmem>>, %arg3: memref<32x96xf32, #tpu.memory_space<vmem>>, %arg4: memref<1x96xf32, #tpu.memory_space<vmem>>, %arg5: memref<1x32xf32, #tpu.memory_space<vmem>>, %arg6: memref<1x32xf32, #tpu.memory_space<vmem>>, %arg7: memref<32x128xf32, #tpu.memory_space<vmem>>, %arg8: memref<1x128xf32, #tpu.memory_space<vmem>>, %arg9: memref<128x32xf32, #tpu.memory_space<vmem>>, %arg10: memref<1x32xf32, #tpu.memory_space<vmem>>, %arg11: memref<1x32xf32, #tpu.memory_space<vmem>>, %arg12: memref<1x32xf32, #tpu.memory_space<vmem>>, %arg13: memref<16x32xf32, #tpu.memory_space<vmem>>, %arg14: memref<2x4x8x8xf32, #tpu.memory_space<vmem>>, %arg15: memref<16x32xf32, #tpu.memory_space<vmem>>) attributes {dimension_semantics = [#tpu.dimension_semantics<parallel>], iteration_bounds = array<i64: 2>, scalar_prefetch = 0 : i64, scratch_operands = 1 : i64, tpu.core_type = #tpu.core_type<tc>, window_params = [{transform_indices = @transform_0, window_bounds = array<i64: 16, 32>}, {transform_indices = @transform_1, window_bounds = array<i64: 2, 1, 8>}, {pipeline_mode = #tpu.pipeline_mode<synchronous>, transform_indices = @transform_2, window_bounds = array<i64: 32, 96>}, {pipeline_mode = #tpu.pipeline_mode<synchronous>, transform_indices = @transform_3, window_bounds = array<i64: 1, 96>}, {pipeline_mode = #tpu.pipeline_mode<synchronous>, transform_indices = @transform_4, window_bounds = array<i64: 1, 32>}, {pipeline_mode = #tpu.pipeline_mode<synchronous>, transform_indices = @transform_5, window_bounds = array<i64: 1, 32>}, {pipeline_mode = #tpu.pipeline_mode<synchronous>, transform_indices = @transform_6, window_bounds = array<i64: 32, 128>}, {pipeline_mode = #tpu.pipeline_mode<synchronous>, transform_indices = @transform_7, window_bounds = array<i64: 1, 128>}, {pipeline_mode = #tpu.pipeline_mode<synchronous>, transform_indices = @transform_8, window_bounds = array<i64: 128, 32>}, {pipeline_mode = #tpu.pipeline_mode<synchronous>, transform_indices = @transform_9, window_bounds = array<i64: 1, 32>}, {pipeline_mode = #tpu.pipeline_mode<synchronous>, transform_indices = @transform_10, window_bounds = array<i64: 1, 32>}, {pipeline_mode = #tpu.pipeline_mode<synchronous>, transform_indices = @transform_11, window_bounds = array<i64: 1, 32>}, {transform_indices = @transform_12, window_bounds = array<i64: 16, 32>}, {transform_indices = @transform_13, window_bounds = array<i64: 2, 4, 8, 8>}]} {
    %c0 = arith.constant 0 : index
    %c0_0 = arith.constant 0 : index
    %0 = vector.load %arg1[%c0, %c0_0] : memref<16x32xf32, #tpu.memory_space<vmem>>, vector<16x32xf32>
    %1 = arith.truncf %0 : vector<16x32xf32> to vector<16x32xbf16>
    %c0_1 = arith.constant 0 : index
    %c0_2 = arith.constant 0 : index
    %2 = vector.load %arg3[%c0_1, %c0_2] : memref<32x96xf32, #tpu.memory_space<vmem>>, vector<32x96xf32>
    %3 = arith.truncf %2 : vector<32x96xf32> to vector<32x96xbf16>
    %cst = arith.constant dense<0.000000e+00> : vector<16x96xf32>
    %4 = tpu.matmul %1, %3, %cst {dimension_numbers = #tpu.dot_dimension_numbers<[1], [0], [0], [1], [0, 0, 1, 1], [], []>} : vector<16x32xbf16>, vector<32x96xbf16>, vector<16x96xf32> -> vector<16x96xf32>
    %c0_3 = arith.constant 0 : index
    %c0_4 = arith.constant 0 : index
    %5 = vector.load %arg4[%c0_3, %c0_4] : memref<1x96xf32, #tpu.memory_space<vmem>>, vector<1x96xf32>
    %6 = vector.broadcast %5 : vector<1x96xf32> to vector<16x96xf32>
    %7 = arith.addf %4, %6 : vector<16x96xf32>
    %8 = vector.extract_strided_slice %7 {offsets = [0, 0], sizes = [8, 96], strides = [1, 1]} : vector<16x96xf32> to vector<8x96xf32>
    %c0_5 = arith.constant 0 : index
    %c0_6 = arith.constant 0 : index
    %c0_7 = arith.constant 0 : index
    %9 = vector.load %arg2[%c0_5, %c0_6, %c0_7] : memref<2x1x8xf32, #tpu.memory_space<vmem>>, vector<1x1x8xf32>
    %10 = vector.shape_cast %9 : vector<1x1x8xf32> to vector<1x8xf32>
    %cst_8 = arith.constant 0.000000e+00 : f32
    %11 = vector.broadcast %cst_8 : f32 to vector<1x8xf32>
    %12 = arith.cmpf oeq, %10, %11 : vector<1x8xf32>
    %cst_9 = arith.constant -1.000000e+03 : f32
    %cst_10 = arith.constant 0.000000e+00 : f32
    %13 = vector.broadcast %cst_9 : f32 to vector<1x8xf32>
    %14 = vector.broadcast %cst_10 : f32 to vector<1x8xf32>
    %15 = arith.select %12, %13, %14 : vector<1x8xi1>, vector<1x8xf32>
    %16 = vector.extract_strided_slice %8 {offsets = [0, 0], sizes = [8, 8], strides = [1, 1]} : vector<8x96xf32> to vector<8x8xf32>
    %cst_11 = arith.constant 0.353553385 : f32
    %17 = vector.broadcast %cst_11 : f32 to vector<8x8xf32>
    %18 = arith.mulf %16, %17 : vector<8x8xf32>
    %19 = vector.extract_strided_slice %8 {offsets = [0, 32], sizes = [8, 8], strides = [1, 1]} : vector<8x96xf32> to vector<8x8xf32>
    %20 = vector.extract_strided_slice %8 {offsets = [0, 64], sizes = [8, 8], strides = [1, 1]} : vector<8x96xf32> to vector<8x8xf32>
    %21 = arith.truncf %18 : vector<8x8xf32> to vector<8x8xbf16>
    %22 = arith.truncf %19 : vector<8x8xf32> to vector<8x8xbf16>
    %cst_12 = arith.constant dense<0.000000e+00> : vector<8x8xf32>
    %23 = tpu.matmul %21, %22, %cst_12 {dimension_numbers = #tpu.dot_dimension_numbers<[1], [1], [0], [0], [0, 0, 1, 0], [], []>} : vector<8x8xbf16>, vector<8x8xbf16>, vector<8x8xf32> -> vector<8x8xf32>
    %24 = vector.broadcast %15 : vector<1x8xf32> to vector<8x8xf32>
    %25 = arith.addf %23, %24 : vector<8x8xf32>
    %cst_13 = arith.constant dense<0xFF800000> : vector<8xf32>
    %26 = vector.multi_reduction <maximumf>, %25, %cst_13 [1] : vector<8x8xf32> to vector<8xf32>
    %27 = vector.shape_cast %26 : vector<8xf32> to vector<8x1xf32>
    %28 = vector.broadcast %27 : vector<8x1xf32> to vector<8x8xf32>
    %29 = arith.subf %25, %28 : vector<8x8xf32>
    %30 = math.exp %29 : vector<8x8xf32>
    %cst_14 = arith.constant dense<0.000000e+00> : vector<8xf32>
    %31 = vector.multi_reduction <add>, %30, %cst_14 [1] : vector<8x8xf32> to vector<8xf32>
    %32 = vector.shape_cast %31 : vector<8xf32> to vector<8x1xf32>
    %33 = tpu.reciprocal %32 {approx = true} : vector<8x1xf32> -> vector<8x1xf32>
    %34 = vector.broadcast %33 : vector<8x1xf32> to vector<8x8xf32>
    %35 = arith.mulf %30, %34 : vector<8x8xf32>
    %36 = arith.truncf %35 : vector<8x8xf32> to vector<8x8xbf16>
    %37 = arith.truncf %20 : vector<8x8xf32> to vector<8x8xbf16>
    %cst_15 = arith.constant dense<0.000000e+00> : vector<8x8xf32>
    %38 = tpu.matmul %36, %37, %cst_15 {dimension_numbers = #tpu.dot_dimension_numbers<[1], [0], [0], [1], [0, 0, 1, 1], [], []>} : vector<8x8xbf16>, vector<8x8xbf16>, vector<8x8xf32> -> vector<8x8xf32>
    %c0_16 = arith.constant 0 : index
    %c0_17 = arith.constant 0 : index
    %39 = vector.load %arg15[%c0_16, %c0_17] : memref<16x32xf32, #tpu.memory_space<vmem>>, vector<8x8xf32>
    tpu.vector_store %arg15[%c0_16, %c0_17], %38 {strides = array<i32>} : memref<16x32xf32, #tpu.memory_space<vmem>>, vector<8x8xf32>,
    %40 = vector.extract_strided_slice %8 {offsets = [0, 8], sizes = [8, 8], strides = [1, 1]} : vector<8x96xf32> to vector<8x8xf32>
    %cst_18 = arith.constant 0.353553385 : f32
    %41 = vector.broadcast %cst_18 : f32 to vector<8x8xf32>
    %42 = arith.mulf %40, %41 : vector<8x8xf32>
    %43 = vector.extract_strided_slice %8 {offsets = [0, 40], sizes = [8, 8], strides = [1, 1]} : vector<8x96xf32> to vector<8x8xf32>
    %44 = vector.extract_strided_slice %8 {offsets = [0, 72], sizes = [8, 8], strides = [1, 1]} : vector<8x96xf32> to vector<8x8xf32>
    %45 = arith.truncf %42 : vector<8x8xf32> to vector<8x8xbf16>
    %46 = arith.truncf %43 : vector<8x8xf32> to vector<8x8xbf16>
    %cst_19 = arith.constant dense<0.000000e+00> : vector<8x8xf32>
    %47 = tpu.matmul %45, %46, %cst_19 {dimension_numbers = #tpu.dot_dimension_numbers<[1], [1], [0], [0], [0, 0, 1, 0], [], []>} : vector<8x8xbf16>, vector<8x8xbf16>, vector<8x8xf32> -> vector<8x8xf32>
    %48 = vector.broadcast %15 : vector<1x8xf32> to vector<8x8xf32>
    %49 = arith.addf %47, %48 : vector<8x8xf32>
    %cst_20 = arith.constant dense<0xFF800000> : vector<8xf32>
    %50 = vector.multi_reduction <maximumf>, %49, %cst_20 [1] : vector<8x8xf32> to vector<8xf32>
    %51 = vector.shape_cast %50 : vector<8xf32> to vector<8x1xf32>
    %52 = vector.broadcast %51 : vector<8x1xf32> to vector<8x8xf32>
    %53 = arith.subf %49, %52 : vector<8x8xf32>
    %54 = math.exp %53 : vector<8x8xf32>
    %cst_21 = arith.constant dense<0.000000e+00> : vector<8xf32>
    %55 = vector.multi_reduction <add>, %54, %cst_21 [1] : vector<8x8xf32> to vector<8xf32>
    %56 = vector.shape_cast %55 : vector<8xf32> to vector<8x1xf32>
    %57 = tpu.reciprocal %56 {approx = true} : vector<8x1xf32> -> vector<8x1xf32>
    %58 = vector.broadcast %57 : vector<8x1xf32> to vector<8x8xf32>
    %59 = arith.mulf %54, %58 : vector<8x8xf32>
    %60 = arith.truncf %59 : vector<8x8xf32> to vector<8x8xbf16>
    %61 = arith.truncf %44 : vector<8x8xf32> to vector<8x8xbf16>
    %cst_22 = arith.constant dense<0.000000e+00> : vector<8x8xf32>
    %62 = tpu.matmul %60, %61, %cst_22 {dimension_numbers = #tpu.dot_dimension_numbers<[1], [0], [0], [1], [0, 0, 1, 1], [], []>} : vector<8x8xbf16>, vector<8x8xbf16>, vector<8x8xf32> -> vector<8x8xf32>
    %c0_23 = arith.constant 0 : index
    %c8 = arith.constant 8 : index
    %63 = vector.load %arg15[%c0_23, %c8] : memref<16x32xf32, #tpu.memory_space<vmem>>, vector<8x8xf32>
    tpu.vector_store %arg15[%c0_23, %c8], %62 {strides = array<i32>} : memref<16x32xf32, #tpu.memory_space<vmem>>, vector<8x8xf32>,
    %64 = vector.extract_strided_slice %8 {offsets = [0, 16], sizes = [8, 8], strides = [1, 1]} : vector<8x96xf32> to vector<8x8xf32>
    %cst_24 = arith.constant 0.353553385 : f32
    %65 = vector.broadcast %cst_24 : f32 to vector<8x8xf32>
    %66 = arith.mulf %64, %65 : vector<8x8xf32>
    %67 = vector.extract_strided_slice %8 {offsets = [0, 48], sizes = [8, 8], strides = [1, 1]} : vector<8x96xf32> to vector<8x8xf32>
    %68 = vector.extract_strided_slice %8 {offsets = [0, 80], sizes = [8, 8], strides = [1, 1]} : vector<8x96xf32> to vector<8x8xf32>
    %69 = arith.truncf %66 : vector<8x8xf32> to vector<8x8xbf16>
    %70 = arith.truncf %67 : vector<8x8xf32> to vector<8x8xbf16>
    %cst_25 = arith.constant dense<0.000000e+00> : vector<8x8xf32>
    %71 = tpu.matmul %69, %70, %cst_25 {dimension_numbers = #tpu.dot_dimension_numbers<[1], [1], [0], [0], [0, 0, 1, 0], [], []>} : vector<8x8xbf16>, vector<8x8xbf16>, vector<8x8xf32> -> vector<8x8xf32>
    %72 = vector.broadcast %15 : vector<1x8xf32> to vector<8x8xf32>
    %73 = arith.addf %71, %72 : vector<8x8xf32>
    %cst_26 = arith.constant dense<0xFF800000> : vector<8xf32>
    %74 = vector.multi_reduction <maximumf>, %73, %cst_26 [1] : vector<8x8xf32> to vector<8xf32>
    %75 = vector.shape_cast %74 : vector<8xf32> to vector<8x1xf32>
    %76 = vector.broadcast %75 : vector<8x1xf32> to vector<8x8xf32>
    %77 = arith.subf %73, %76 : vector<8x8xf32>
    %78 = math.exp %77 : vector<8x8xf32>
    %cst_27 = arith.constant dense<0.000000e+00> : vector<8xf32>
    %79 = vector.multi_reduction <add>, %78, %cst_27 [1] : vector<8x8xf32> to vector<8xf32>
    %80 = vector.shape_cast %79 : vector<8xf32> to vector<8x1xf32>
    %81 = tpu.reciprocal %80 {approx = true} : vector<8x1xf32> -> vector<8x1xf32>
    %82 = vector.broadcast %81 : vector<8x1xf32> to vector<8x8xf32>
    %83 = arith.mulf %78, %82 : vector<8x8xf32>
    %84 = arith.truncf %83 : vector<8x8xf32> to vector<8x8xbf16>
    %85 = arith.truncf %68 : vector<8x8xf32> to vector<8x8xbf16>
    %cst_28 = arith.constant dense<0.000000e+00> : vector<8x8xf32>
    %86 = tpu.matmul %84, %85, %cst_28 {dimension_numbers = #tpu.dot_dimension_numbers<[1], [0], [0], [1], [0, 0, 1, 1], [], []>} : vector<8x8xbf16>, vector<8x8xbf16>, vector<8x8xf32> -> vector<8x8xf32>
    %c0_29 = arith.constant 0 : index
    %c16 = arith.constant 16 : index
    %87 = vector.load %arg15[%c0_29, %c16] : memref<16x32xf32, #tpu.memory_space<vmem>>, vector<8x8xf32>
    tpu.vector_store %arg15[%c0_29, %c16], %86 {strides = array<i32>} : memref<16x32xf32, #tpu.memory_space<vmem>>, vector<8x8xf32>,
    %88 = vector.extract_strided_slice %8 {offsets = [0, 24], sizes = [8, 8], strides = [1, 1]} : vector<8x96xf32> to vector<8x8xf32>
    %cst_30 = arith.constant 0.353553385 : f32
    %89 = vector.broadcast %cst_30 : f32 to vector<8x8xf32>
    %90 = arith.mulf %88, %89 : vector<8x8xf32>
    %91 = vector.extract_strided_slice %8 {offsets = [0, 56], sizes = [8, 8], strides = [1, 1]} : vector<8x96xf32> to vector<8x8xf32>
    %92 = vector.extract_strided_slice %8 {offsets = [0, 88], sizes = [8, 8], strides = [1, 1]} : vector<8x96xf32> to vector<8x8xf32>
    %93 = arith.truncf %90 : vector<8x8xf32> to vector<8x8xbf16>
    %94 = arith.truncf %91 : vector<8x8xf32> to vector<8x8xbf16>
    %cst_31 = arith.constant dense<0.000000e+00> : vector<8x8xf32>
    %95 = tpu.matmul %93, %94, %cst_31 {dimension_numbers = #tpu.dot_dimension_numbers<[1], [1], [0], [0], [0, 0, 1, 0], [], []>} : vector<8x8xbf16>, vector<8x8xbf16>, vector<8x8xf32> -> vector<8x8xf32>
    %96 = vector.broadcast %15 : vector<1x8xf32> to vector<8x8xf32>
    %97 = arith.addf %95, %96 : vector<8x8xf32>
    %cst_32 = arith.constant dense<0xFF800000> : vector<8xf32>
    %98 = vector.multi_reduction <maximumf>, %97, %cst_32 [1] : vector<8x8xf32> to vector<8xf32>
    %99 = vector.shape_cast %98 : vector<8xf32> to vector<8x1xf32>
    %100 = vector.broadcast %99 : vector<8x1xf32> to vector<8x8xf32>
    %101 = arith.subf %97, %100 : vector<8x8xf32>
    %102 = math.exp %101 : vector<8x8xf32>
    %cst_33 = arith.constant dense<0.000000e+00> : vector<8xf32>
    %103 = vector.multi_reduction <add>, %102, %cst_33 [1] : vector<8x8xf32> to vector<8xf32>
    %104 = vector.shape_cast %103 : vector<8xf32> to vector<8x1xf32>
    %105 = tpu.reciprocal %104 {approx = true} : vector<8x1xf32> -> vector<8x1xf32>
    %106 = vector.broadcast %105 : vector<8x1xf32> to vector<8x8xf32>
    %107 = arith.mulf %102, %106 : vector<8x8xf32>
    %108 = arith.truncf %107 : vector<8x8xf32> to vector<8x8xbf16>
    %109 = arith.truncf %92 : vector<8x8xf32> to vector<8x8xbf16>
    %cst_34 = arith.constant dense<0.000000e+00> : vector<8x8xf32>
    %110 = tpu.matmul %108, %109, %cst_34 {dimension_numbers = #tpu.dot_dimension_numbers<[1], [0], [0], [1], [0, 0, 1, 1], [], []>} : vector<8x8xbf16>, vector<8x8xbf16>, vector<8x8xf32> -> vector<8x8xf32>
    %c0_35 = arith.constant 0 : index
    %c24 = arith.constant 24 : index
    %111 = vector.load %arg15[%c0_35, %c24] : memref<16x32xf32, #tpu.memory_space<vmem>>, vector<8x8xf32>
    tpu.vector_store %arg15[%c0_35, %c24], %110 {strides = array<i32>} : memref<16x32xf32, #tpu.memory_space<vmem>>, vector<8x8xf32>,
    %112 = vector.shape_cast %35 : vector<8x8xf32> to vector<1x8x8xf32>
    %113 = vector.shape_cast %59 : vector<8x8xf32> to vector<1x8x8xf32>
    %114 = vector.shape_cast %83 : vector<8x8xf32> to vector<1x8x8xf32>
    %115 = vector.shape_cast %107 : vector<8x8xf32> to vector<1x8x8xf32>
    %116 = tpu.concatenate %112, %113, %114, %115 in 0 : vector<1x8x8xf32>, vector<1x8x8xf32>, vector<1x8x8xf32>, vector<1x8x8xf32> -> vector<4x8x8xf32>
    %c0_36 = arith.constant 0 : index
    %c0_37 = arith.constant 0 : index
    %c0_38 = arith.constant 0 : index
    %c0_39 = arith.constant 0 : index
    %117 = vector.load %arg14[%c0_36, %c0_37, %c0_38, %c0_39] : memref<2x4x8x8xf32, #tpu.memory_space<vmem>>, vector<1x4x8x8xf32>
    %118 = vector.shape_cast %117 : vector<1x4x8x8xf32> to vector<4x8x8xf32>
    %119 = vector.shape_cast %116 : vector<4x8x8xf32> to vector<1x4x8x8xf32>
    tpu.vector_store %arg14[%c0_36, %c0_37, %c0_38, %c0_39], %119 {strides = array<i32>} : memref<2x4x8x8xf32, #tpu.memory_space<vmem>>, vector<1x4x8x8xf32>,
    %120 = vector.extract_strided_slice %7 {offsets = [8, 0], sizes = [8, 96], strides = [1, 1]} : vector<16x96xf32> to vector<8x96xf32>
    %c1 = arith.constant 1 : index
    %c0_40 = arith.constant 0 : index
    %c0_41 = arith.constant 0 : index
    %121 = vector.load %arg2[%c1, %c0_40, %c0_41] : memref<2x1x8xf32, #tpu.memory_space<vmem>>, vector<1x1x8xf32>
    %122 = vector.shape_cast %121 : vector<1x1x8xf32> to vector<1x8xf32>
    %cst_42 = arith.constant 0.000000e+00 : f32
    %123 = vector.broadcast %cst_42 : f32 to vector<1x8xf32>
    %124 = arith.cmpf oeq, %122, %123 : vector<1x8xf32>
    %cst_43 = arith.constant -1.000000e+03 : f32
    %cst_44 = arith.constant 0.000000e+00 : f32
    %125 = vector.broadcast %cst_43 : f32 to vector<1x8xf32>
    %126 = vector.broadcast %cst_44 : f32 to vector<1x8xf32>
    %127 = arith.select %124, %125, %126 : vector<1x8xi1>, vector<1x8xf32>
    %128 = vector.extract_strided_slice %120 {offsets = [0, 0], sizes = [8, 8], strides = [1, 1]} : vector<8x96xf32> to vector<8x8xf32>
    %cst_45 = arith.constant 0.353553385 : f32
    %129 = vector.broadcast %cst_45 : f32 to vector<8x8xf32>
    %130 = arith.mulf %128, %129 : vector<8x8xf32>
    %131 = vector.extract_strided_slice %120 {offsets = [0, 32], sizes = [8, 8], strides = [1, 1]} : vector<8x96xf32> to vector<8x8xf32>
    %132 = vector.extract_strided_slice %120 {offsets = [0, 64], sizes = [8, 8], strides = [1, 1]} : vector<8x96xf32> to vector<8x8xf32>
    %133 = arith.truncf %130 : vector<8x8xf32> to vector<8x8xbf16>
    %134 = arith.truncf %131 : vector<8x8xf32> to vector<8x8xbf16>
    %cst_46 = arith.constant dense<0.000000e+00> : vector<8x8xf32>
    %135 = tpu.matmul %133, %134, %cst_46 {dimension_numbers = #tpu.dot_dimension_numbers<[1], [1], [0], [0], [0, 0, 1, 0], [], []>} : vector<8x8xbf16>, vector<8x8xbf16>, vector<8x8xf32> -> vector<8x8xf32>
    %136 = vector.broadcast %127 : vector<1x8xf32> to vector<8x8xf32>
    %137 = arith.addf %135, %136 : vector<8x8xf32>
    %cst_47 = arith.constant dense<0xFF800000> : vector<8xf32>
    %138 = vector.multi_reduction <maximumf>, %137, %cst_47 [1] : vector<8x8xf32> to vector<8xf32>
    %139 = vector.shape_cast %138 : vector<8xf32> to vector<8x1xf32>
    %140 = vector.broadcast %139 : vector<8x1xf32> to vector<8x8xf32>
    %141 = arith.subf %137, %140 : vector<8x8xf32>
    %142 = math.exp %141 : vector<8x8xf32>
    %cst_48 = arith.constant dense<0.000000e+00> : vector<8xf32>
    %143 = vector.multi_reduction <add>, %142, %cst_48 [1] : vector<8x8xf32> to vector<8xf32>
    %144 = vector.shape_cast %143 : vector<8xf32> to vector<8x1xf32>
    %145 = tpu.reciprocal %144 {approx = true} : vector<8x1xf32> -> vector<8x1xf32>
    %146 = vector.broadcast %145 : vector<8x1xf32> to vector<8x8xf32>
    %147 = arith.mulf %142, %146 : vector<8x8xf32>
    %148 = arith.truncf %147 : vector<8x8xf32> to vector<8x8xbf16>
    %149 = arith.truncf %132 : vector<8x8xf32> to vector<8x8xbf16>
    %cst_49 = arith.constant dense<0.000000e+00> : vector<8x8xf32>
    %150 = tpu.matmul %148, %149, %cst_49 {dimension_numbers = #tpu.dot_dimension_numbers<[1], [0], [0], [1], [0, 0, 1, 1], [], []>} : vector<8x8xbf16>, vector<8x8xbf16>, vector<8x8xf32> -> vector<8x8xf32>
    %c8_50 = arith.constant 8 : index
    %c0_51 = arith.constant 0 : index
    %151 = vector.load %arg15[%c8_50, %c0_51] : memref<16x32xf32, #tpu.memory_space<vmem>>, vector<8x8xf32>
    tpu.vector_store %arg15[%c8_50, %c0_51], %150 {strides = array<i32>} : memref<16x32xf32, #tpu.memory_space<vmem>>, vector<8x8xf32>,
    %152 = vector.extract_strided_slice %120 {offsets = [0, 8], sizes = [8, 8], strides = [1, 1]} : vector<8x96xf32> to vector<8x8xf32>
    %cst_52 = arith.constant 0.353553385 : f32
    %153 = vector.broadcast %cst_52 : f32 to vector<8x8xf32>
    %154 = arith.mulf %152, %153 : vector<8x8xf32>
    %155 = vector.extract_strided_slice %120 {offsets = [0, 40], sizes = [8, 8], strides = [1, 1]} : vector<8x96xf32> to vector<8x8xf32>
    %156 = vector.extract_strided_slice %120 {offsets = [0, 72], sizes = [8, 8], strides = [1, 1]} : vector<8x96xf32> to vector<8x8xf32>
    %157 = arith.truncf %154 : vector<8x8xf32> to vector<8x8xbf16>
    %158 = arith.truncf %155 : vector<8x8xf32> to vector<8x8xbf16>
    %cst_53 = arith.constant dense<0.000000e+00> : vector<8x8xf32>
    %159 = tpu.matmul %157, %158, %cst_53 {dimension_numbers = #tpu.dot_dimension_numbers<[1], [1], [0], [0], [0, 0, 1, 0], [], []>} : vector<8x8xbf16>, vector<8x8xbf16>, vector<8x8xf32> -> vector<8x8xf32>
    %160 = vector.broadcast %127 : vector<1x8xf32> to vector<8x8xf32>
    %161 = arith.addf %159, %160 : vector<8x8xf32>
    %cst_54 = arith.constant dense<0xFF800000> : vector<8xf32>
    %162 = vector.multi_reduction <maximumf>, %161, %cst_54 [1] : vector<8x8xf32> to vector<8xf32>
    %163 = vector.shape_cast %162 : vector<8xf32> to vector<8x1xf32>
    %164 = vector.broadcast %163 : vector<8x1xf32> to vector<8x8xf32>
    %165 = arith.subf %161, %164 : vector<8x8xf32>
    %166 = math.exp %165 : vector<8x8xf32>
    %cst_55 = arith.constant dense<0.000000e+00> : vector<8xf32>
    %167 = vector.multi_reduction <add>, %166, %cst_55 [1] : vector<8x8xf32> to vector<8xf32>
    %168 = vector.shape_cast %167 : vector<8xf32> to vector<8x1xf32>
    %169 = tpu.reciprocal %168 {approx = true} : vector<8x1xf32> -> vector<8x1xf32>
    %170 = vector.broadcast %169 : vector<8x1xf32> to vector<8x8xf32>
    %171 = arith.mulf %166, %170 : vector<8x8xf32>
    %172 = arith.truncf %171 : vector<8x8xf32> to vector<8x8xbf16>
    %173 = arith.truncf %156 : vector<8x8xf32> to vector<8x8xbf16>
    %cst_56 = arith.constant dense<0.000000e+00> : vector<8x8xf32>
    %174 = tpu.matmul %172, %173, %cst_56 {dimension_numbers = #tpu.dot_dimension_numbers<[1], [0], [0], [1], [0, 0, 1, 1], [], []>} : vector<8x8xbf16>, vector<8x8xbf16>, vector<8x8xf32> -> vector<8x8xf32>
    %c8_57 = arith.constant 8 : index
    %c8_58 = arith.constant 8 : index
    %175 = vector.load %arg15[%c8_57, %c8_58] : memref<16x32xf32, #tpu.memory_space<vmem>>, vector<8x8xf32>
    tpu.vector_store %arg15[%c8_57, %c8_58], %174 {strides = array<i32>} : memref<16x32xf32, #tpu.memory_space<vmem>>, vector<8x8xf32>,
    %176 = vector.extract_strided_slice %120 {offsets = [0, 16], sizes = [8, 8], strides = [1, 1]} : vector<8x96xf32> to vector<8x8xf32>
    %cst_59 = arith.constant 0.353553385 : f32
    %177 = vector.broadcast %cst_59 : f32 to vector<8x8xf32>
    %178 = arith.mulf %176, %177 : vector<8x8xf32>
    %179 = vector.extract_strided_slice %120 {offsets = [0, 48], sizes = [8, 8], strides = [1, 1]} : vector<8x96xf32> to vector<8x8xf32>
    %180 = vector.extract_strided_slice %120 {offsets = [0, 80], sizes = [8, 8], strides = [1, 1]} : vector<8x96xf32> to vector<8x8xf32>
    %181 = arith.truncf %178 : vector<8x8xf32> to vector<8x8xbf16>
    %182 = arith.truncf %179 : vector<8x8xf32> to vector<8x8xbf16>
    %cst_60 = arith.constant dense<0.000000e+00> : vector<8x8xf32>
    %183 = tpu.matmul %181, %182, %cst_60 {dimension_numbers = #tpu.dot_dimension_numbers<[1], [1], [0], [0], [0, 0, 1, 0], [], []>} : vector<8x8xbf16>, vector<8x8xbf16>, vector<8x8xf32> -> vector<8x8xf32>
    %184 = vector.broadcast %127 : vector<1x8xf32> to vector<8x8xf32>
    %185 = arith.addf %183, %184 : vector<8x8xf32>
    %cst_61 = arith.constant dense<0xFF800000> : vector<8xf32>
    %186 = vector.multi_reduction <maximumf>, %185, %cst_61 [1] : vector<8x8xf32> to vector<8xf32>
    %187 = vector.shape_cast %186 : vector<8xf32> to vector<8x1xf32>
    %188 = vector.broadcast %187 : vector<8x1xf32> to vector<8x8xf32>
    %189 = arith.subf %185, %188 : vector<8x8xf32>
    %190 = math.exp %189 : vector<8x8xf32>
    %cst_62 = arith.constant dense<0.000000e+00> : vector<8xf32>
    %191 = vector.multi_reduction <add>, %190, %cst_62 [1] : vector<8x8xf32> to vector<8xf32>
    %192 = vector.shape_cast %191 : vector<8xf32> to vector<8x1xf32>
    %193 = tpu.reciprocal %192 {approx = true} : vector<8x1xf32> -> vector<8x1xf32>
    %194 = vector.broadcast %193 : vector<8x1xf32> to vector<8x8xf32>
    %195 = arith.mulf %190, %194 : vector<8x8xf32>
    %196 = arith.truncf %195 : vector<8x8xf32> to vector<8x8xbf16>
    %197 = arith.truncf %180 : vector<8x8xf32> to vector<8x8xbf16>
    %cst_63 = arith.constant dense<0.000000e+00> : vector<8x8xf32>
    %198 = tpu.matmul %196, %197, %cst_63 {dimension_numbers = #tpu.dot_dimension_numbers<[1], [0], [0], [1], [0, 0, 1, 1], [], []>} : vector<8x8xbf16>, vector<8x8xbf16>, vector<8x8xf32> -> vector<8x8xf32>
    %c8_64 = arith.constant 8 : index
    %c16_65 = arith.constant 16 : index
    %199 = vector.load %arg15[%c8_64, %c16_65] : memref<16x32xf32, #tpu.memory_space<vmem>>, vector<8x8xf32>
    tpu.vector_store %arg15[%c8_64, %c16_65], %198 {strides = array<i32>} : memref<16x32xf32, #tpu.memory_space<vmem>>, vector<8x8xf32>,
    %200 = vector.extract_strided_slice %120 {offsets = [0, 24], sizes = [8, 8], strides = [1, 1]} : vector<8x96xf32> to vector<8x8xf32>
    %cst_66 = arith.constant 0.353553385 : f32
    %201 = vector.broadcast %cst_66 : f32 to vector<8x8xf32>
    %202 = arith.mulf %200, %201 : vector<8x8xf32>
    %203 = vector.extract_strided_slice %120 {offsets = [0, 56], sizes = [8, 8], strides = [1, 1]} : vector<8x96xf32> to vector<8x8xf32>
    %204 = vector.extract_strided_slice %120 {offsets = [0, 88], sizes = [8, 8], strides = [1, 1]} : vector<8x96xf32> to vector<8x8xf32>
    %205 = arith.truncf %202 : vector<8x8xf32> to vector<8x8xbf16>
    %206 = arith.truncf %203 : vector<8x8xf32> to vector<8x8xbf16>
    %cst_67 = arith.constant dense<0.000000e+00> : vector<8x8xf32>
    %207 = tpu.matmul %205, %206, %cst_67 {dimension_numbers = #tpu.dot_dimension_numbers<[1], [1], [0], [0], [0, 0, 1, 0], [], []>} : vector<8x8xbf16>, vector<8x8xbf16>, vector<8x8xf32> -> vector<8x8xf32>
    %208 = vector.broadcast %127 : vector<1x8xf32> to vector<8x8xf32>
    %209 = arith.addf %207, %208 : vector<8x8xf32>
    %cst_68 = arith.constant dense<0xFF800000> : vector<8xf32>
    %210 = vector.multi_reduction <maximumf>, %209, %cst_68 [1] : vector<8x8xf32> to vector<8xf32>
    %211 = vector.shape_cast %210 : vector<8xf32> to vector<8x1xf32>
    %212 = vector.broadcast %211 : vector<8x1xf32> to vector<8x8xf32>
    %213 = arith.subf %209, %212 : vector<8x8xf32>
    %214 = math.exp %213 : vector<8x8xf32>
    %cst_69 = arith.constant dense<0.000000e+00> : vector<8xf32>
    %215 = vector.multi_reduction <add>, %214, %cst_69 [1] : vector<8x8xf32> to vector<8xf32>
    %216 = vector.shape_cast %215 : vector<8xf32> to vector<8x1xf32>
    %217 = tpu.reciprocal %216 {approx = true} : vector<8x1xf32> -> vector<8x1xf32>
    %218 = vector.broadcast %217 : vector<8x1xf32> to vector<8x8xf32>
    %219 = arith.mulf %214, %218 : vector<8x8xf32>
    %220 = arith.truncf %219 : vector<8x8xf32> to vector<8x8xbf16>
    %221 = arith.truncf %204 : vector<8x8xf32> to vector<8x8xbf16>
    %cst_70 = arith.constant dense<0.000000e+00> : vector<8x8xf32>
    %222 = tpu.matmul %220, %221, %cst_70 {dimension_numbers = #tpu.dot_dimension_numbers<[1], [0], [0], [1], [0, 0, 1, 1], [], []>} : vector<8x8xbf16>, vector<8x8xbf16>, vector<8x8xf32> -> vector<8x8xf32>
    %c8_71 = arith.constant 8 : index
    %c24_72 = arith.constant 24 : index
    %223 = vector.load %arg15[%c8_71, %c24_72] : memref<16x32xf32, #tpu.memory_space<vmem>>, vector<8x8xf32>
    tpu.vector_store %arg15[%c8_71, %c24_72], %222 {strides = array<i32>} : memref<16x32xf32, #tpu.memory_space<vmem>>, vector<8x8xf32>,
    %224 = vector.shape_cast %147 : vector<8x8xf32> to vector<1x8x8xf32>
    %225 = vector.shape_cast %171 : vector<8x8xf32> to vector<1x8x8xf32>
    %226 = vector.shape_cast %195 : vector<8x8xf32> to vector<1x8x8xf32>
    %227 = vector.shape_cast %219 : vector<8x8xf32> to vector<1x8x8xf32>
    %228 = tpu.concatenate %224, %225, %226, %227 in 0 : vector<1x8x8xf32>, vector<1x8x8xf32>, vector<1x8x8xf32>, vector<1x8x8xf32> -> vector<4x8x8xf32>
    %c1_73 = arith.constant 1 : index
    %c0_74 = arith.constant 0 : index
    %c0_75 = arith.constant 0 : index
    %c0_76 = arith.constant 0 : index
    %229 = vector.load %arg14[%c1_73, %c0_74, %c0_75, %c0_76] : memref<2x4x8x8xf32, #tpu.memory_space<vmem>>, vector<1x4x8x8xf32>
    %230 = vector.shape_cast %229 : vector<1x4x8x8xf32> to vector<4x8x8xf32>
    %231 = vector.shape_cast %228 : vector<4x8x8xf32> to vector<1x4x8x8xf32>
    tpu.vector_store %arg14[%c1_73, %c0_74, %c0_75, %c0_76], %231 {strides = array<i32>} : memref<2x4x8x8xf32, #tpu.memory_space<vmem>>, vector<1x4x8x8xf32>,
    %c0_77 = arith.constant 0 : index
    %c0_78 = arith.constant 0 : index
    %232 = vector.load %arg15[%c0_77, %c0_78] : memref<16x32xf32, #tpu.memory_space<vmem>>, vector<16x32xf32>
    %233 = arith.addf %0, %232 : vector<16x32xf32>
    %c0_79 = arith.constant 0 : index
    %c0_80 = arith.constant 0 : index
    %234 = vector.load %arg5[%c0_79, %c0_80] : memref<1x32xf32, #tpu.memory_space<vmem>>, vector<1x32xf32>
    %c0_81 = arith.constant 0 : index
    %c0_82 = arith.constant 0 : index
    %235 = vector.load %arg6[%c0_81, %c0_82] : memref<1x32xf32, #tpu.memory_space<vmem>>, vector<1x32xf32>
    %cst_83 = arith.constant dense<0.000000e+00> : vector<16xf32>
    %236 = vector.multi_reduction <add>, %233, %cst_83 [1] : vector<16x32xf32> to vector<16xf32>
    %237 = vector.shape_cast %236 : vector<16xf32> to vector<16x1xf32>
    %cst_84 = arith.constant 3.200000e+01 : f32
    %238 = vector.broadcast %cst_84 : f32 to vector<16x1xf32>
    %239 = arith.divf %237, %238 : vector<16x1xf32>
    %240 = vector.broadcast %239 : vector<16x1xf32> to vector<16x32xf32>
    %241 = arith.subf %233, %240 : vector<16x32xf32>
    %242 = arith.mulf %241, %241 : vector<16x32xf32>
    %cst_85 = arith.constant dense<0.000000e+00> : vector<16xf32>
    %243 = vector.multi_reduction <add>, %242, %cst_85 [1] : vector<16x32xf32> to vector<16xf32>
    %244 = vector.shape_cast %243 : vector<16xf32> to vector<16x1xf32>
    %cst_86 = arith.constant 3.200000e+01 : f32
    %245 = vector.broadcast %cst_86 : f32 to vector<16x1xf32>
    %246 = arith.divf %244, %245 : vector<16x1xf32>
    %cst_87 = arith.constant 9.99999974E-6 : f32
    %247 = vector.broadcast %cst_87 : f32 to vector<16x1xf32>
    %248 = arith.addf %246, %247 : vector<16x1xf32>
    %249 = math.rsqrt %248 : vector<16x1xf32>
    %250 = vector.broadcast %249 : vector<16x1xf32> to vector<16x32xf32>
    %251 = arith.mulf %241, %250 : vector<16x32xf32>
    %252 = vector.broadcast %234 : vector<1x32xf32> to vector<16x32xf32>
    %253 = arith.mulf %251, %252 : vector<16x32xf32>
    %254 = vector.broadcast %235 : vector<1x32xf32> to vector<16x32xf32>
    %255 = arith.addf %253, %254 : vector<16x32xf32>
    %256 = arith.truncf %255 : vector<16x32xf32> to vector<16x32xbf16>
    %c0_88 = arith.constant 0 : index
    %c0_89 = arith.constant 0 : index
    %257 = vector.load %arg7[%c0_88, %c0_89] : memref<32x128xf32, #tpu.memory_space<vmem>>, vector<32x128xf32>
    %258 = arith.truncf %257 : vector<32x128xf32> to vector<32x128xbf16>
    %cst_90 = arith.constant dense<0.000000e+00> : vector<16x128xf32>
    %259 = tpu.matmul %256, %258, %cst_90 {dimension_numbers = #tpu.dot_dimension_numbers<[1], [0], [0], [1], [0, 0, 1, 1], [], []>} : vector<16x32xbf16>, vector<32x128xbf16>, vector<16x128xf32> -> vector<16x128xf32>
    %c0_91 = arith.constant 0 : index
    %c0_92 = arith.constant 0 : index
    %260 = vector.load %arg8[%c0_91, %c0_92] : memref<1x128xf32, #tpu.memory_space<vmem>>, vector<1x128xf32>
    %261 = vector.broadcast %260 : vector<1x128xf32> to vector<16x128xf32>
    %262 = arith.addf %259, %261 : vector<16x128xf32>
    %cst_93 = arith.constant 0.000000e+00 : f32
    %263 = vector.broadcast %cst_93 : f32 to vector<16x128xf32>
    %264 = arith.maximumf %262, %263 : vector<16x128xf32>
    %265 = arith.truncf %264 : vector<16x128xf32> to vector<16x128xbf16>
    %c0_94 = arith.constant 0 : index
    %c0_95 = arith.constant 0 : index
    %266 = vector.load %arg9[%c0_94, %c0_95] : memref<128x32xf32, #tpu.memory_space<vmem>>, vector<128x32xf32>
    %267 = arith.truncf %266 : vector<128x32xf32> to vector<128x32xbf16>
    %cst_96 = arith.constant dense<0.000000e+00> : vector<16x32xf32>
    %268 = tpu.matmul %265, %267, %cst_96 {dimension_numbers = #tpu.dot_dimension_numbers<[1], [0], [0], [1], [0, 0, 1, 1], [], []>} : vector<16x128xbf16>, vector<128x32xbf16>, vector<16x32xf32> -> vector<16x32xf32>
    %c0_97 = arith.constant 0 : index
    %c0_98 = arith.constant 0 : index
    %269 = vector.load %arg10[%c0_97, %c0_98] : memref<1x32xf32, #tpu.memory_space<vmem>>, vector<1x32xf32>
    %270 = vector.broadcast %269 : vector<1x32xf32> to vector<16x32xf32>
    %271 = arith.addf %268, %270 : vector<16x32xf32>
    %272 = arith.addf %0, %271 : vector<16x32xf32>
    %c0_99 = arith.constant 0 : index
    %c0_100 = arith.constant 0 : index
    %273 = vector.load %arg11[%c0_99, %c0_100] : memref<1x32xf32, #tpu.memory_space<vmem>>, vector<1x32xf32>
    %c0_101 = arith.constant 0 : index
    %c0_102 = arith.constant 0 : index
    %274 = vector.load %arg12[%c0_101, %c0_102] : memref<1x32xf32, #tpu.memory_space<vmem>>, vector<1x32xf32>
    %cst_103 = arith.constant dense<0.000000e+00> : vector<16xf32>
    %275 = vector.multi_reduction <add>, %272, %cst_103 [1] : vector<16x32xf32> to vector<16xf32>
    %276 = vector.shape_cast %275 : vector<16xf32> to vector<16x1xf32>
    %cst_104 = arith.constant 3.200000e+01 : f32
    %277 = vector.broadcast %cst_104 : f32 to vector<16x1xf32>
    %278 = arith.divf %276, %277 : vector<16x1xf32>
    %279 = vector.broadcast %278 : vector<16x1xf32> to vector<16x32xf32>
    %280 = arith.subf %272, %279 : vector<16x32xf32>
    %281 = arith.mulf %280, %280 : vector<16x32xf32>
    %cst_105 = arith.constant dense<0.000000e+00> : vector<16xf32>
    %282 = vector.multi_reduction <add>, %281, %cst_105 [1] : vector<16x32xf32> to vector<16xf32>
    %283 = vector.shape_cast %282 : vector<16xf32> to vector<16x1xf32>
    %cst_106 = arith.constant 3.200000e+01 : f32
    %284 = vector.broadcast %cst_106 : f32 to vector<16x1xf32>
    %285 = arith.divf %283, %284 : vector<16x1xf32>
    %cst_107 = arith.constant 9.99999974E-6 : f32
    %286 = vector.broadcast %cst_107 : f32 to vector<16x1xf32>
    %287 = arith.addf %285, %286 : vector<16x1xf32>
    %288 = math.rsqrt %287 : vector<16x1xf32>
    %289 = vector.broadcast %288 : vector<16x1xf32> to vector<16x32xf32>
    %290 = arith.mulf %280, %289 : vector<16x32xf32>
    %291 = vector.broadcast %273 : vector<1x32xf32> to vector<16x32xf32>
    %292 = arith.mulf %290, %291 : vector<16x32xf32>
    %293 = vector.broadcast %274 : vector<1x32xf32> to vector<16x32xf32>
    %294 = arith.addf %292, %293 : vector<16x32xf32>
    %c0_108 = arith.constant 0 : index
    %c0_109 = arith.constant 0 : index
    %295 = vector.load %arg13[%c0_108, %c0_109] : memref<16x32xf32, #tpu.memory_space<vmem>>, vector<16x32xf32>
    tpu.vector_store %arg13[%c0_108, %c0_109], %294 {strides = array<i32>} : memref<16x32xf32, #tpu.memory_space<vmem>>, vector<16x32xf32>,
    return
  }
  func.func @transform_0(%arg0: i32) -> (i32, i32) {
    %c0_i32 = arith.constant 0 : i32
    %c0_i32_0 = arith.constant 0 : i32
    return %arg0, %c0_i32 : i32, i32
  }
  func.func @transform_1(%arg0: i32) -> (i32, i32, i32) {
    %c0_i32 = arith.constant 0 : i32
    %c0_i32_0 = arith.constant 0 : i32
    %c0_i32_1 = arith.constant 0 : i32
    return %arg0, %c0_i32, %c0_i32_0 : i32, i32, i32
  }
  func.func @transform_2(%arg0: i32) -> (i32, i32) {
    %c0_i32 = arith.constant 0 : i32
    %c0_i32_0 = arith.constant 0 : i32
    %c0_i32_1 = arith.constant 0 : i32
    return %c0_i32, %c0_i32_0 : i32, i32
  }
  func.func @transform_3(%arg0: i32) -> (i32, i32) {
    %c0_i32 = arith.constant 0 : i32
    %c0_i32_0 = arith.constant 0 : i32
    %c0_i32_1 = arith.constant 0 : i32
    return %c0_i32, %c0_i32_0 : i32, i32
  }
  func.func @transform_4(%arg0: i32) -> (i32, i32) {
    %c0_i32 = arith.constant 0 : i32
    %c0_i32_0 = arith.constant 0 : i32
    %c0_i32_1 = arith.constant 0 : i32
    return %c0_i32, %c0_i32_0 : i32, i32
  }
  func.func @transform_5(%arg0: i32) -> (i32, i32) {
    %c0_i32 = arith.constant 0 : i32
    %c0_i32_0 = arith.constant 0 : i32
    %c0_i32_1 = arith.constant 0 : i32
    return %c0_i32, %c0_i32_0 : i32, i32
  }
  func.func @transform_6(%arg0: i32) -> (i32, i32) {
    %c0_i32 = arith.constant 0 : i32
    %c0_i32_0 = arith.constant 0 : i32
    %c0_i32_1 = arith.constant 0 : i32
    return %c0_i32, %c0_i32_0 : i32, i32
  }
  func.func @transform_7(%arg0: i32) -> (i32, i32) {
    %c0_i32 = arith.constant 0 : i32
    %c0_i32_0 = arith.constant 0 : i32
    %c0_i32_1 = arith.constant 0 : i32
    return %c0_i32, %c0_i32_0 : i32, i32
  }
  func.func @transform_8(%arg0: i32) -> (i32, i32) {
    %c0_i32 = arith.constant 0 : i32
    %c0_i32_0 = arith.constant 0 : i32
    %c0_i32_1 = arith.constant 0 : i32
    return %c0_i32, %c0_i32_0 : i32, i32
  }
  func.func @transform_9(%arg0: i32) -> (i32, i32) {
    %c0_i32 = arith.constant 0 : i32
    %c0_i32_0 = arith.constant 0 : i32
    %c0_i32_1 = arith.constant 0 : i32
    return %c0_i32, %c0_i32_0 : i32, i32
  }
  func.func @transform_10(%arg0: i32) -> (i32, i32) {
    %c0_i32 = arith.constant 0 : i32
    %c0_i32_0 = arith.constant 0 : i32
    %c0_i32_1 = arith.constant 0 : i32
    return %c0_i32, %c0_i32_0 : i32, i32
  }
  func.func @transform_11(%arg0: i32) -> (i32, i32) {
    %c0_i32 = arith.constant 0 : i32
    %c0_i32_0 = arith.constant 0 : i32
    %c0_i32_1 = arith.constant 0 : i32
    return %c0_i32, %c0_i32_0 : i32, i32
  }
  func.func @transform_12(%arg0: i32) -> (i32, i32) {
    %c0_i32 = arith.constant 0 : i32
    %c0_i32_0 = arith.constant 0 : i32
    return %arg0, %c0_i32 : i32, i32
  }
  func.func @transform_13(%arg0: i32) -> (i32, i32, i32, i32) {
    %c0_i32 = arith.constant 0 : i32
    %c0_i32_0 = arith.constant 0 : i32
    %c0_i32_1 = arith.constant 0 : i32
    %c0_i32_2 = arith.constant 0 : i32
    return %arg0, %c0_i32, %c0_i32_0, %c0_i32_1 : i32, i32, i32, i32
  }
}

</mosaic_0001>

<llo_original>
// kernel: tpu_custom_call.1
$region0: #{tpu_custom_call.1}
  #allocation0 [shape = 'u32[]', space=smem, size = 0x4, offset = 0x4, fixed_abs, tag = 'smem constant byte address 0x4 - core index']
  #allocation1 [shape = 'u32[144,128]{1,0:T(1,128)}', space=vmem, size = 0x12000, scoped, tag = 'internal scratch']
  #allocation2 [shape = 'f32[16,32]{1,0:T(8,128)}', space=vmem, size = 0x2000, scoped, tag = 'scratch operand']
  %s0 = inlined_call_operand.vmem [shape: f32[32,32], index: 0, kind: input, shape index: {}]
  %s1 = inlined_call_operand.vmem [shape: f32[4,1,8], index: 1, kind: input, shape index: {}]
  %s2 = inlined_call_operand.vmem [shape: f32[32,96], index: 2, kind: input, shape index: {}]
  %s3 = inlined_call_operand.vmem [shape: f32[1,96], index: 3, kind: input, shape index: {}]
  %s4 = inlined_call_operand.vmem [shape: f32[1,32], index: 4, kind: input, shape index: {}]
  %s5 = inlined_call_operand.vmem [shape: f32[1,32], index: 5, kind: input, shape index: {}]
  %s6 = inlined_call_operand.vmem [shape: f32[32,128], index: 6, kind: input, shape index: {}]
  %s7 = inlined_call_operand.vmem [shape: f32[1,128], index: 7, kind: input, shape index: {}]
  %s8 = inlined_call_operand.vmem [shape: f32[128,32], index: 8, kind: input, shape index: {}]
  %s9 = inlined_call_operand.vmem [shape: f32[1,32], index: 9, kind: input, shape index: {}]
  %s10 = inlined_call_operand.vmem [shape: f32[1,32], index: 10, kind: input, shape index: {}]
  %s11 = inlined_call_operand.vmem [shape: f32[1,32], index: 11, kind: input, shape index: {}]
  %s12 = inlined_call_operand.hbm [shape: f32[32,32], index: 12, kind: output, shape index: {0}]
  %s13 = inlined_call_operand.hbm [shape: f32[4,4,8,8], index: 13, kind: output, shape index: {1}]
  %14 = xla_tuple %s12, %s13
  %s15 = sld [smem:[#allocation0]]
  $region89: #{tpu_custom_call.1} parent=0
    _
  %s17 = ssub.s32 1, %s15
  %s18 = scalar_select 0, %s17, %s15
  $region1: #{tpu_custom_call.1} parent=0
    #allocation3 [shape = 'u8[16384]{0}', space=vmem, size = 0x4000, scoped, tag = 'output window, operand 0']
    #allocation4 [shape = 's32[2]{0}', space=sflag, size = 0x8, scoped, tag = 'scoped memory for tpu_custom_call.1']
    #allocation5 [shape = 'u8[65536]{0}', space=vmem, size = 0x10000, scoped, tag = 'output window, operand 1']
    #allocation6 [shape = 's32[2]{0}', space=sflag, size = 0x8, scoped, tag = 'scoped memory for tpu_custom_call.1']
    %19 = vsyncpa [#allocation4], 0
    %s20 = scalar_lea.sflag [#allocation4], 1
    %21 = vsyncpa %s20, 0
    %22 = vsyncpa [#allocation6], 0
    %s23 = scalar_lea.sflag [#allocation6], 1
    %24 = vsyncpa %s23, 0
    loop: start=0, step=1, limit=4
    $region2: #{tpu_custom_call.1} parent=1 // loop_pre_header
      _
    $region3: #{tpu_custom_call.1} parent=1 // loop_header
      %s26 = sphi 0, %s30
      %p27 = scmp.ge.s32.totalorder %s26, 4
      %s36 = sphi 0, %s38
      %s39 = sphi 0, %s36
      %s40 = sphi 0, %s39
      %s56 = sphi 0, %s40
      %s62 = sphi 0, %s64
      %s65 = sphi 0, %s62
      %s66 = sphi 0, %s65
      %s82 = sphi 0, %s66
      %s86 = sphi 0, %s86
      %s88 = sphi 0, %s86
      %s89 = sphi 0, %s88
      %s103 = sphi 0, %s89
      %s107 = sphi 0, %s107
      %s109 = sphi 0, %s107
      %s110 = sphi 0, %s109
      %s124 = sphi 0, %s110
      %s128 = sphi 0, %s128
      %s130 = sphi 0, %s128
      %s131 = sphi 0, %s130
      %s145 = sphi 0, %s131
      %s149 = sphi 0, %s149
      %s151 = sphi 0, %s149
      %s152 = sphi 0, %s151
      %s166 = sphi 0, %s152
      %s170 = sphi 0, %s170
      %s172 = sphi 0, %s170
      %s173 = sphi 0, %s172
      %s187 = sphi 0, %s173
      %s191 = sphi 0, %s191
      %s193 = sphi 0, %s191
      %s194 = sphi 0, %s193
      %s208 = sphi 0, %s194
      %s212 = sphi 0, %s212
      %s214 = sphi 0, %s212
      %s215 = sphi 0, %s214
      %s229 = sphi 0, %s215
      %s233 = sphi 0, %s233
      %s235 = sphi 0, %s233
      %s236 = sphi 0, %s235
      %s250 = sphi 0, %s236
      %s254 = sphi 0, %s254
      %s256 = sphi 0, %s254
      %s257 = sphi 0, %s256
      %s271 = sphi 0, %s257
      %s275 = sphi 0, %s275
      %s277 = sphi 0, %s275
      %s278 = sphi 0, %s277
      %s292 = sphi 0, %s278
      %s298 = sphi 0, %s300
      %s301 = sphi 0, %s298
      %s302 = sphi 0, %s301
      %s318 = sphi 0, %s302
      %s324 = sphi 0, %s326
      %s327 = sphi 0, %s324
      %s328 = sphi 0, %s327
      %s344 = sphi 0, %s328
    $region4: #{tpu_custom_call.1} parent=1 // loop_header_branch
      %29 = sbr.rel (%p27) target = $region8
    $region5: #{tpu_custom_call.1} parent=1 // loop_body
      %s31 = ssub.s32 %s26, 1
      %s32 = ssub.s32 %s26, 2
      %s33 = sadd.s32 %s26, 1
      %s34 = ssub.s32 %s26, %s33
      %p35 = scmp.eq.s32.totalorder %s34, 0
      %s37 = sadd.s32 %s36, 1
      %s38 = scalar_select %p35, %s36, %s37
      %p41 = pneg %p35
      %p42 = scmp.eq.s32.totalorder %s26, 1
      %p43 = por %p41, %p42
      %p44 = scmp.ne.s32.totalorder %s36, %s39
      %p45 = scmp.eq.s32.totalorder %s26, 0
      %p46 = por %p44, %p45
      %p47 = scmp.ne.s32.totalorder %s36, %s39
      %p48 = scmp.eq.s32.totalorder %s31, 1
      %p49 = por %p47, %p48
      %p50 = scmp.ne.s32.totalorder %s39, %s40
      %p51 = scmp.eq.s32.totalorder %s31, 0
      %p52 = por %p50, %p51
      %p53 = scmp.ne.s32.totalorder %s39, %s40
      %p54 = scmp.eq.s32.totalorder %s32, 1
      %p55 = por %p53, %p54
      %p57 = scmp.ne.s32.totalorder %s40, %s56
      %p58 = scmp.eq.s32.totalorder %s32, 0
      %p59 = por %p57, %p58
      %s60 = ssub.s32 %s26, %s33
      %p61 = scmp.eq.s32.totalorder %s60, 0
      %s63 = sadd.s32 %s62, 1
      %s64 = scalar_select %p61, %s62, %s63
      %p67 = pneg %p61
      %p68 = scmp.eq.s32.totalorder %s26, 1
      %p69 = por %p67, %p68
      %p70 = scmp.ne.s32.totalorder %s62, %s65
      %p71 = scmp.eq.s32.totalorder %s26, 0
      %p72 = por %p70, %p71
      %p73 = scmp.ne.s32.totalorder %s62, %s65
      %p74 = scmp.eq.s32.totalorder %s31, 1
      %p75 = por %p73, %p74
      %p76 = scmp.ne.s32.totalorder %s65, %s66
      %p77 = scmp.eq.s32.totalorder %s31, 0
      %p78 = por %p76, %p77
      %p79 = scmp.ne.s32.totalorder %s65, %s66
      %p80 = scmp.eq.s32.totalorder %s32, 1
      %p81 = por %p79, %p80
      %p83 = scmp.ne.s32.totalorder %s66, %s82
      %p84 = scmp.eq.s32.totalorder %s32, 0
      %p85 = por %p83, %p84
      %s87 = sadd.s32 %s86, 1
      %p90 = scmp.eq.s32.totalorder %s26, 1
      %p91 = scmp.ne.s32.totalorder %s86, %s88
      %p92 = scmp.eq.s32.totalorder %s26, 0
      %p93 = por %p91, %p92
      %p94 = scmp.ne.s32.totalorder %s86, %s88
      %p95 = scmp.eq.s32.totalorder %s31, 1
      %p96 = por %p94, %p95
      %p97 = scmp.ne.s32.totalorder %s88, %s89
      %p98 = scmp.eq.s32.totalorder %s31, 0
      %p99 = por %p97, %p98
      %p100 = scmp.ne.s32.totalorder %s88, %s89
      %p101 = scmp.eq.s32.totalorder %s32, 1
      %p102 = por %p100, %p101
      %p104 = scmp.ne.s32.totalorder %s89, %s103
      %p105 = scmp.eq.s32.totalorder %s32, 0
      %p106 = por %p104, %p105
      %s108 = sadd.s32 %s107, 1
      %p111 = scmp.eq.s32.totalorder %s26, 1
      %p112 = scmp.ne.s32.totalorder %s107, %s109
      %p113 = scmp.eq.s32.totalorder %s26, 0
      %p114 = por %p112, %p113
      %p115 = scmp.ne.s32.totalorder %s107, %s109
      %p116 = scmp.eq.s32.totalorder %s31, 1
      %p117 = por %p115, %p116
      %p118 = scmp.ne.s32.totalorder %s109, %s110
      %p119 = scmp.eq.s32.totalorder %s31, 0
      %p120 = por %p118, %p119
      %p121 = scmp.ne.s32.totalorder %s109, %s110
      %p122 = scmp.eq.s32.totalorder %s32, 1
      %p123 = por %p121, %p122
      %p125 = scmp.ne.s32.totalorder %s110, %s124
      %p126 = scmp.eq.s32.totalorder %s32, 0
      %p127 = por %p125, %p126
      %s129 = sadd.s32 %s128, 1
      %p132 = scmp.eq.s32.totalorder %s26, 1
      %p133 = scmp.ne.s32.totalorder %s128, %s130
      %p134 = scmp.eq.s32.totalorder %s26, 0
      %p135 = por %p133, %p134
      %p136 = scmp.ne.s32.totalorder %s128, %s130
      %p137 = scmp.eq.s32.totalorder %s31, 1
      %p138 = por %p136, %p137
      %p139 = scmp.ne.s32.totalorder %s130, %s131
      %p140 = scmp.eq.s32.totalorder %s31, 0
      %p141 = por %p139, %p140
      %p142 = scmp.ne.s32.totalorder %s130, %s131
      %p143 = scmp.eq.s32.totalorder %s32, 1
      %p144 = por %p142, %p143
      %p146 = scmp.ne.s32.totalorder %s131, %s145
      %p147 = scmp.eq.s32.totalorder %s32, 0
      %p148 = por %p146, %p147
      %s150 = sadd.s32 %s149, 1
      %p153 = scmp.eq.s32.totalorder %s26, 1
      %p154 = scmp.ne.s32.totalorder %s149, %s151
      %p155 = scmp.eq.s32.totalorder %s26, 0
      %p156 = por %p154, %p155
      %p157 = scmp.ne.s32.totalorder %s149, %s151
      %p158 = scmp.eq.s32.totalorder %s31, 1
      %p159 = por %p157, %p158
      %p160 = scmp.ne.s32.totalorder %s151, %s152
      %p161 = scmp.eq.s32.totalorder %s31, 0
      %p162 = por %p160, %p161
      %p163 = scmp.ne.s32.totalorder %s151, %s152
      %p164 = scmp.eq.s32.totalorder %s32, 1
      %p165 = por %p163, %p164
      %p167 = scmp.ne.s32.totalorder %s152, %s166
      %p168 = scmp.eq.s32.totalorder %s32, 0
      %p169 = por %p167, %p168
      %s171 = sadd.s32 %s170, 1
      %p174 = scmp.eq.s32.totalorder %s26, 1
      %p175 = scmp.ne.s32.totalorder %s170, %s172
      %p176 = scmp.eq.s32.totalorder %s26, 0
      %p177 = por %p175, %p176
      %p178 = scmp.ne.s32.totalorder %s170, %s172
      %p179 = scmp.eq.s32.totalorder %s31, 1
      %p180 = por %p178, %p179
      %p181 = scmp.ne.s32.totalorder %s172, %s173
      %p182 = scmp.eq.s32.totalorder %s31, 0
      %p183 = por %p181, %p182
      %p184 = scmp.ne.s32.totalorder %s172, %s173
      %p185 = scmp.eq.s32.totalorder %s32, 1
      %p186 = por %p184, %p185
      %p188 = scmp.ne.s32.totalorder %s173, %s187
      %p189 = scmp.eq.s32.totalorder %s32, 0
      %p190 = por %p188, %p189
      %s192 = sadd.s32 %s191, 1
      %p195 = scmp.eq.s32.totalorder %s26, 1
      %p196 = scmp.ne.s32.totalorder %s191, %s193
      %p197 = scmp.eq.s32.totalorder %s26, 0
      %p198 = por %p196, %p197
      %p199 = scmp.ne.s32.totalorder %s191, %s193
      %p200 = scmp.eq.s32.totalorder %s31, 1
      %p201 = por %p199, %p200
      %p202 = scmp.ne.s32.totalorder %s193, %s194
      %p203 = scmp.eq.s32.totalorder %s31, 0
      %p204 = por %p202, %p203
      %p205 = scmp.ne.s32.totalorder %s193, %s194
      %p206 = scmp.eq.s32.totalorder %s32, 1
      %p207 = por %p205, %p206
      %p209 = scmp.ne.s32.totalorder %s194, %s208
      %p210 = scmp.eq.s32.totalorder %s32, 0
      %p211 = por %p209, %p210
      %s213 = sadd.s32 %s212, 1
      %p216 = scmp.eq.s32.totalorder %s26, 1
      %p217 = scmp.ne.s32.totalorder %s212, %s214
      %p218 = scmp.eq.s32.totalorder %s26, 0
      %p219 = por %p217, %p218
      %p220 = scmp.ne.s32.totalorder %s212, %s214
      %p221 = scmp.eq.s32.totalorder %s31, 1
      %p222 = por %p220, %p221
      %p223 = scmp.ne.s32.totalorder %s214, %s215
      %p224 = scmp.eq.s32.totalorder %s31, 0
      %p225 = por %p223, %p224
      %p226 = scmp.ne.s32.totalorder %s214, %s215
      %p227 = scmp.eq.s32.totalorder %s32, 1
      %p228 = por %p226, %p227
      %p230 = scmp.ne.s32.totalorder %s215, %s229
      %p231 = scmp.eq.s32.totalorder %s32, 0
      %p232 = por %p230, %p231
      %s234 = sadd.s32 %s233, 1
      %p237 = scmp.eq.s32.totalorder %s26, 1
      %p238 = scmp.ne.s32.totalorder %s233, %s235
      %p239 = scmp.eq.s32.totalorder %s26, 0
      %p240 = por %p238, %p239
      %p241 = scmp.ne.s32.totalorder %s233, %s235
      %p242 = scmp.eq.s32.totalorder %s31, 1
      %p243 = por %p241, %p242
      %p244 = scmp.ne.s32.totalorder %s235, %s236
      %p245 = scmp.eq.s32.totalorder %s31, 0
      %p246 = por %p244, %p245
      %p247 = scmp.ne.s32.totalorder %s235, %s236
      %p248 = scmp.eq.s32.totalorder %s32, 1
      %p249 = por %p247, %p248
      %p251 = scmp.ne.s32.totalorder %s236, %s250
      %p252 = scmp.eq.s32.totalorder %s32, 0
      %p253 = por %p251, %p252
      %s255 = sadd.s32 %s254, 1
      %p258 = scmp.eq.s32.totalorder %s26, 1
      %p259 = scmp.ne.s32.totalorder %s254, %s256
      %p260 = scmp.eq.s32.totalorder %s26, 0
      %p261 = por %p259, %p260
      %p262 = scmp.ne.s32.totalorder %s254, %s256
      %p263 = scmp.eq.s32.totalorder %s31, 1
      %p264 = por %p262, %p263
      %p265 = scmp.ne.s32.totalorder %s256, %s257
      %p266 = scmp.eq.s32.totalorder %s31, 0
      %p267 = por %p265, %p266
      %p268 = scmp.ne.s32.totalorder %s256, %s257
      %p269 = scmp.eq.s32.totalorder %s32, 1
      %p270 = por %p268, %p269
      %p272 = scmp.ne.s32.totalorder %s257, %s271
      %p273 = scmp.eq.s32.totalorder %s32, 0
      %p274 = por %p272, %p273
      %s276 = sadd.s32 %s275, 1
      %p279 = scmp.eq.s32.totalorder %s26, 1
      %p280 = scmp.ne.s32.totalorder %s275, %s277
      %p281 = scmp.eq.s32.totalorder %s26, 0
      %p282 = por %p280, %p281
      %p283 = scmp.ne.s32.totalorder %s275, %s277
      %p284 = scmp.eq.s32.totalorder %s31, 1
      %p285 = por %p283, %p284
      %p286 = scmp.ne.s32.totalorder %s277, %s278
      %p287 = scmp.eq.s32.totalorder %s31, 0
      %p288 = por %p286, %p287
      %p289 = scmp.ne.s32.totalorder %s277, %s278
      %p290 = scmp.eq.s32.totalorder %s32, 1
      %p291 = por %p289, %p290
      %p293 = scmp.ne.s32.totalorder %s278, %s292
      %p294 = scmp.eq.s32.totalorder %s32, 0
      %p295 = por %p293, %p294
      %s296 = ssub.s32 %s26, %s33
      %p297 = scmp.eq.s32.totalorder %s296, 0
      %s299 = sadd.s32 %s298, 1
      %s300 = scalar_select %p297, %s298, %s299
      %p303 = pneg %p297
      %p304 = scmp.eq.s32.totalorder %s26, 1
      %p305 = por %p303, %p304
      %p306 = scmp.ne.s32.totalorder %s298, %s301
      %p307 = scmp.eq.s32.totalorder %s26, 0
      %p308 = por %p306, %p307
      %p309 = scmp.ne.s32.totalorder %s298, %s301
      %p310 = scmp.eq.s32.totalorder %s31, 1
      %p311 = por %p309, %p310
      %p312 = scmp.ne.s32.totalorder %s301, %s302
      %p313 = scmp.eq.s32.totalorder %s31, 0
      %p314 = por %p312, %p313
      %p315 = scmp.ne.s32.totalorder %s301, %s302
      %p316 = scmp.eq.s32.totalorder %s32, 1
      %p317 = por %p315, %p316
      %p319 = scmp.ne.s32.totalorder %s302, %s318
      %p320 = scmp.eq.s32.totalorder %s32, 0
      %p321 = por %p319, %p320
      %s322 = ssub.s32 %s26, %s33
      %p323 = scmp.eq.s32.totalorder %s322, 0
      %s325 = sadd.s32 %s324, 1
      %s326 = scalar_select %p323, %s324, %s325
      %p329 = pneg %p323
      %p330 = scmp.eq.s32.totalorder %s26, 1
      %p331 = por %p329, %p330
      %p332 = scmp.ne.s32.totalorder %s324, %s327
      %p333 = scmp.eq.s32.totalorder %s26, 0
      %p334 = por %p332, %p333
      %p335 = scmp.ne.s32.totalorder %s324, %s327
      %p336 = scmp.eq.s32.totalorder %s31, 1
      %p337 = por %p335, %p336
      %p338 = scmp.ne.s32.totalorder %s327, %s328
      %p339 = scmp.eq.s32.totalorder %s31, 0
      %p340 = por %p338, %p339
      %p341 = scmp.ne.s32.totalorder %s327, %s328
      %p342 = scmp.eq.s32.totalorder %s32, 1
      %p343 = por %p341, %p342
      %p345 = scmp.ne.s32.totalorder %s328, %s344
      %p346 = scmp.eq.s32.totalorder %s32, 0
      %p347 = por %p345, %p346
      %p348 = scmp.le.s32.totalorder 1, %s26
      %p349 = scmp.lt.s32.totalorder %s26, 3
      %p350 = pnand %p348, %p349
      %p351 = pneg %p350
      // Predicated region
      $region9: #{tpu_custom_call.1} parent=5 // pred_check
        _
      $region10: #{tpu_custom_call.1} parent=5 // pred_check_branch
        %353 = sbr.rel (%p350) target = $region12
      $region11: #{tpu_custom_call.1} parent=5 // pred_region
        %s354 = ssub.s32 %s26, 1
        // Predicated region
        $region13: #{tpu_custom_call.1} parent=11 // pred_check
          %p355 = pneg %p99
        $region14: #{tpu_custom_call.1} parent=11 // pred_check_branch
          %357 = sbr.rel (%p355) target = $region16
        $region15: #{tpu_custom_call.1} parent=11 // pred_region
          _
        $region16: #{tpu_custom_call.1} parent=11 // pred_fallthru
          _
        // Predicated region
        $region17: #{tpu_custom_call.1} parent=11 // pred_check
          %p358 = pneg %p120
        $region18: #{tpu_custom_call.1} parent=11 // pred_check_branch
          %360 = sbr.rel (%p358) target = $region20
        $region19: #{tpu_custom_call.1} parent=11 // pred_region
          _
        $region20: #{tpu_custom_call.1} parent=11 // pred_fallthru
          _
        // Predicated region
        $region21: #{tpu_custom_call.1} parent=11 // pred_check
          %p361 = pneg %p141
        $region22: #{tpu_custom_call.1} parent=11 // pred_check_branch
          %363 = sbr.rel (%p361) target = $region24
        $region23: #{tpu_custom_call.1} parent=11 // pred_region
          _
        $region24: #{tpu_custom_call.1} parent=11 // pred_fallthru
          _
        // Predicated region
        $region25: #{tpu_custom_call.1} parent=11 // pred_check
          %p364 = pneg %p162
        $region26: #{tpu_custom_call.1} parent=11 // pred_check_branch
          %366 = sbr.rel (%p364) target = $region28
        $region27: #{tpu_custom_call.1} parent=11 // pred_region
          _
        $region28: #{tpu_custom_call.1} parent=11 // pred_fallthru
          _
        // Predicated region
        $region29: #{tpu_custom_call.1} parent=11 // pred_check
          %p367 = pneg %p183
        $region30: #{tpu_custom_call.1} parent=11 // pred_check_branch
          %369 = sbr.rel (%p367) target = $region32
        $region31: #{tpu_custom_call.1} parent=11 // pred_region
          _
        $region32: #{tpu_custom_call.1} parent=11 // pred_fallthru
          _
        // Predicated region
        $region33: #{tpu_custom_call.1} parent=11 // pred_check
          %p370 = pneg %p204
        $region34: #{tpu_custom_call.1} parent=11 // pred_check_branch
          %372 = sbr.rel (%p370) target = $region36
        $region35: #{tpu_custom_call.1} parent=11 // pred_region
          _
        $region36: #{tpu_custom_call.1} parent=11 // pred_fallthru
          _
        // Predicated region
        $region37: #{tpu_custom_call.1} parent=11 // pred_check
          %p373 = pneg %p225
        $region38: #{tpu_custom_call.1} parent=11 // pred_check_branch
          %375 = sbr.rel (%p373) target = $region40
        $region39: #{tpu_custom_call.1} parent=11 // pred_region
          _
        $region40: #{tpu_custom_call.1} parent=11 // pred_fallthru
          _
        // Predicated region
        $region41: #{tpu_custom_call.1} parent=11 // pred_check
          %p376 = pneg %p246
        $region42: #{tpu_custom_call.1} parent=11 // pred_check_branch
          %378 = sbr.rel (%p376) target = $region44
        $region43: #{tpu_custom_call.1} parent=11 // pred_region
          _
        $region44: #{tpu_custom_call.1} parent=11 // pred_fallthru
          _
        // Predicated region
        $region45: #{tpu_custom_call.1} parent=11 // pred_check
          %p379 = pneg %p267
        $region46: #{tpu_custom_call.1} parent=11 // pred_check_branch
          %381 = sbr.rel (%p379) target = $region48
        $region47: #{tpu_custom_call.1} parent=11 // pred_region
          _
        $region48: #{tpu_custom_call.1} parent=11 // pred_fallthru
          _
        // Predicated region
        $region49: #{tpu_custom_call.1} parent=11 // pred_check
          %p382 = pneg %p288
        $region50: #{tpu_custom_call.1} parent=11 // pred_check_branch
          %384 = sbr.rel (%p382) target = $region52
        $region51: #{tpu_custom_call.1} parent=11 // pred_region
          _
        $region52: #{tpu_custom_call.1} parent=11 // pred_fallthru
          _
      $region12: #{tpu_custom_call.1} parent=5 // pred_fallthru
        _
      %p385 = scmp.lt.s32.totalorder %s26, 2
      // Predicated region
      $region53: #{tpu_custom_call.1} parent=5 // pred_check
        %p386 = pneg %p385
      $region54: #{tpu_custom_call.1} parent=5 // pred_check_branch
        %388 = sbr.rel (%p386) target = $region56
      $region55: #{tpu_custom_call.1} parent=5 // pred_region
        // Predicated region
        $region57: #{tpu_custom_call.1} parent=55 // pred_check
          %p389 = pneg %p46
        $region58: #{tpu_custom_call.1} parent=55 // pred_check_branch
          %391 = sbr.rel (%p389) target = $region60
        $region59: #{tpu_custom_call.1} parent=55 // pred_region
          %s392 = smul.u32 2, %s26
          %p393 = scmp.lt.s32.totalorder %s392, 3
          %s394 = scalar_select %p393, %s392, 3
          %s395 = smul.addr %s394, 8
          %s396 = scalar_lea.vmem %s0, %s395
          %s397 = smul.u32 2, %s26
        $region60: #{tpu_custom_call.1} parent=55 // pred_fallthru
          _
        // Predicated region
        $region61: #{tpu_custom_call.1} parent=55 // pred_check
          %p398 = pneg %p72
        $region62: #{tpu_custom_call.1} parent=55 // pred_check_branch
          %400 = sbr.rel (%p398) target = $region64
        $region63: #{tpu_custom_call.1} parent=55 // pred_region
          %s401 = smul.u32 2, %s26
          %p402 = scmp.lt.s32.totalorder %s401, 3
          %s403 = scalar_select %p402, %s401, 3
          %s404 = scalar_lea.vmem %s1, %s403
          %s405 = smul.u32 2, %s26
        $region64: #{tpu_custom_call.1} parent=55 // pred_fallthru
          _
      $region56: #{tpu_custom_call.1} parent=5 // pred_fallthru
        _
      %p406 = scmp.le.s32.totalorder 1, %s26
      %p407 = scmp.lt.s32.totalorder %s26, 3
      %p408 = pnand %p406, %p407
      %p409 = pneg %p408
      // Predicated region
      $region65: #{tpu_custom_call.1} parent=5 // pred_check
        _
      $region66: #{tpu_custom_call.1} parent=5 // pred_check_branch
        %411 = sbr.rel (%p408) target = $region68
      $region67: #{tpu_custom_call.1} parent=5 // pred_region
        %s412 = ssub.s32 %s26, 1
        %s413 = smul.u32 2, %s31
        %p414 = scmp.lt.s32.totalorder %s413, 3
        %s415 = scalar_select %p414, %s413, 3
        %s416 = smul.addr %s415, 8
        %s417 = scalar_lea.vmem %s0, %s416
        %p418 = pneg %p52
        %p419 = pneg %p49
        %s420 = smul.u32 2, %s31
        %p421 = scmp.lt.s32.totalorder %s420, 3
        %s422 = scalar_select %p421, %s420, 3
        %s423 = scalar_lea.vmem %s1, %s422
        %p424 = pneg %p78
        %p425 = pneg %p75
        %p426 = pneg %p99
        %p427 = pneg %p96
        %p428 = pneg %p120
        %p429 = pneg %p117
        %p430 = pneg %p141
        %p431 = pneg %p138
        %p432 = pneg %p162
        %p433 = pneg %p159
        %p434 = pneg %p183
        %p435 = pneg %p180
        %p436 = pneg %p204
        %p437 = pneg %p201
        %p438 = pneg %p225
        %p439 = pneg %p222
        %p440 = pneg %p246
        %p441 = pneg %p243
        %p442 = pneg %p267
        %p443 = pneg %p264
        %p444 = pneg %p288
        %p445 = pneg %p285
        %p446 = pneg %p314
        %p447 = pneg %p311
        %s448 = sand.u32 %s301, 1
        %s449 = scalar_lea.sflag [#allocation4], %s448
        %s450 = sand.u32 %s301, 1
        %s451 = smul.addr %s450, 16
        %s452 = scalar_lea.vmem [#allocation3], %s451
        %p453 = pneg %p340
        %p454 = pneg %p337
        %s455 = sand.u32 %s327, 1
        %s456 = scalar_lea.sflag [#allocation6], %s455
        %s457 = sand.u32 %s327, 1
        %s458 = smul.addr %s457, 64
        %s459 = scalar_lea.vmem [#allocation5], %s458
        %s460 = smul.u32 2, %s31
        %p461 = scmp.lt.s32.totalorder %s460, 3
        %s462 = scalar_select %p461, %s460, 3
        %s463 = smul.addr %s462, 8
        %s464 = scalar_lea.vmem %s0, %s463
        %s465 = smul.u32 2, %s31
        %s466 = smul.u32 2, %s31
        %p467 = scmp.lt.s32.totalorder %s466, 3
        %s468 = scalar_select %p467, %s466, 3
        %s469 = scalar_lea.vmem %s1, %s468
        %s470 = smul.u32 2, %s31
        %s471 = smul.u32 2, %s31
        %s472 = smul.u32 2, %s31
        %v474 = vld [vmem:[%s464] sm:$0xff]
        %v475 = vld [vmem:[%s464 + $0x8] sm:$0xff]
        %v476 = vpack.c.bf16 %v475, %v474
        %v477 = vld [vmem:[%s2] sm:$0xff]
        %v478 = vld [vmem:[%s2 + $0x8] sm:$0xff]
        %v479 = vld [vmem:[%s2 + $0x10] sm:$0xff]
        %v480 = vld [vmem:[%s2 + $0x18] sm:$0xff]
        %v481 = vpack.c.bf16 %v478, %v477
        %v482 = vpack.c.bf16 %v480, %v479
        %v483 = vld [vmem:[%s3] sm:$0x1]
        %v485 = vlaneseq
        %v486 = vshrl.u32 %v485, 7
        %v487 = vsub.s32 0, %v486
        %v488 = vrot.slane %v483, %v487
        %vm490 = vcmask 261120
        %v492 = vsel %vm490, %v476, 0
        %494 = vmatprep.subr.bf16.mxu0 0
        %495 = vmatpush1.bf16.msra.mxu0 %v481
        %496 = vmatprep.subr.bf16.mxu0 0
        %497 = vmatpush1.bf16.msra.mxu0 %v482
        %498 = vmatprep.subr.bf16.mxu0 0
        %499 = vmatpush1.bf16.msra.mxu0 0
        %500 = vmatprep.subr.bf16.mxu0 0
        %501 = vmatpush1.bf16.msra.mxu0 0
        %502 = vmatprep.subr.bf16.mxu0 0
        %503 = vmatpush1.bf16.msra.mxu0 0
        %504 = vmatprep.subr.bf16.mxu0 0
        %505 = vmatpush1.bf16.msra.mxu0 0
        %506 = vmatprep.subr.bf16.mxu0 0
        %507 = vmatpush1.bf16.msra.mxu0 0
        %508 = vmatprep.subr.bf16.mxu0 0
        %509 = vmatpush1.bf16.msra.mxu0 0
        %510 = vmatprep.subr.bf16.mxu0 0
        %511 = vmatpush1.bf16.msra.mxu0 0
        %512 = vmatprep.subr.bf16.mxu0 0
        %513 = vmatpush1.bf16.msra.mxu0 0
        %514 = vmatprep.subr.bf16.mxu0 0
        %515 = vmatpush1.bf16.msra.mxu0 0
        %516 = vmatprep.subr.bf16.mxu0 0
        %517 = vmatpush1.bf16.msra.mxu0 0
        %518 = vmatprep.subr.bf16.mxu0 0
        %519 = vmatpush1.bf16.msra.mxu0 0
        %520 = vmatprep.subr.bf16.mxu0 0
        %521 = vmatpush1.bf16.msra.mxu0 0
        %522 = vmatprep.subr.bf16.mxu0 0
        %523 = vmatpush1.bf16.msra.mxu0 0
        %524 = vmatprep.subr.bf16.mxu0 0
        %525 = vmatpush1.bf16.msra.mxu0 0
        %526 = vmatprep.mubr.bf16.mxu0 0
        %527 = vmatmul.mubr.bf16.gmra.mrb[0].mxu0 %v492
        %v528 = vpop.f32.mrb[0].mxu0
        %v529 = vadd.f32 %v488, %v528
        %v530 = vpop.f32.mrb[0].mxu0
        %v531 = vpop.f32.mrb[0].mxu0
        %v532 = vadd.f32 %v488, %v531
        %v533 = vpop.f32.mrb[0].mxu0
        %534 = vdwg.mxu0
        %v535 = vld [vmem:[%s469] sm:$0x1]
        %vm536 = vcmp.eq.f32.partialorder %v535, 0.0
        %v537 = vsel %vm536, -1000.0, 0.0
        %v538 = vmul.f32 %v529, 0.35355338
        %v539 = vpack.c.bf16 %v538, %v538
        %v540 = vpack.c.bf16 %v529, %v529
        %v542 = vlaneseq
        %v543 = vshrl.u32 %v542, 7
        %v544 = vsub.s32 0, %v543
        %v545 = vrot.slane %v537, %v544
        %548 = vrot.lane.b32.xlu0 %v540, 96
        %v549 = vpop.permute.xlu0 %548
        %vm550 = vcmask 64512
        %v552 = vsel %vm550, %v539, 0
        %v555 = vsel %vm550, %v549, 0
        %557 = vmatprep.subr.bf16.mxu0 0
        %558 = vmatpush1.bf16.xpose.msra.mxu0 %v555
        %559 = vmatprep.subr.bf16.mxu0 0
        %560 = vmatpush1.bf16.xpose.msra.mxu0 0
        %561 = vmatprep.subr.bf16.mxu0 0
        %562 = vmatpush1.bf16.xpose.msra.mxu0 0
        %563 = vmatprep.subr.bf16.mxu0 0
        %564 = vmatpush1.bf16.xpose.msra.mxu0 0
        %565 = vmatprep.subr.bf16.mxu0 0
        %566 = vmatpush1.bf16.xpose.msra.mxu0 0
        %567 = vmatprep.subr.bf16.mxu0 0
        %568 = vmatpush1.bf16.xpose.msra.mxu0 0
        %569 = vmatprep.subr.bf16.mxu0 0
        %570 = vmatpush1.bf16.xpose.msra.mxu0 0
        %571 = vmatprep.subr.bf16.mxu0 0
        %572 = vmatpush1.bf16.xpose.msra.mxu0 0
        %573 = vmatprep.subr.bf16.mxu0 0
        %574 = vmatpush1.bf16.xpose.msra.mxu0 0
        %575 = vmatprep.subr.bf16.mxu0 0
        %576 = vmatpush1.bf16.xpose.msra.mxu0 0
        %577 = vmatprep.subr.bf16.mxu0 0
        %578 = vmatpush1.bf16.xpose.msra.mxu0 0
        %579 = vmatprep.subr.bf16.mxu0 0
        %580 = vmatpush1.bf16.xpose.msra.mxu0 0
        %581 = vmatprep.subr.bf16.mxu0 0
        %582 = vmatpush1.bf16.xpose.msra.mxu0 0
        %583 = vmatprep.subr.bf16.mxu0 0
        %584 = vmatpush1.bf16.xpose.msra.mxu0 0
        %585 = vmatprep.subr.bf16.mxu0 0
        %586 = vmatpush1.bf16.xpose.msra.mxu0 0
        %587 = vmatprep.subr.bf16.mxu0 0
        %588 = vmatpush1.bf16.xpose.msra.mxu0 0
        %589 = vmatprep.mubr.bf16.mxu0 0
        %590 = vmatmul.mubr.bf16.gmra.mrb[0].mxu0 %v552
        %v591 = vpop.f32.mrb[0].mxu0
        %v592 = vadd.f32 %v545, %v591
        %v593 = vpop.f32.mrb[0].mxu0
        %v594 = vpop.f32.mrb[0].mxu0
        %v595 = vpop.f32.mrb[0].mxu0
        %596 = vdwg.mxu0
        %v597 = vsel %vm550, %v592, -inf
        %598 = vmax.xlane.f32.xlu0 %v597
        %v599 = vpop.xlane.xlu0 %598
        %v600 = vsub.f32 %v592, %v599
        %v601 = vmul.f32 %v600, 1.442695
        %v602 = vpow.pop %v601
        %v603 = vsel %vm550, %v602, 0.0
        %604 = vadd.xlane.f32.xlu0 %v603
        %v605 = vpop.xlane.xlu0 %604
        %v606 = vrcp.pop %v605
        %v607 = vmul.f32 %v602, %v606
        %v608 = vpack.c.bf16 %v607, %v607
        %609 = vrot.lane.b32.xlu0 %v540, 64
        %v610 = vpop.permute.xlu0 %609
        %v612 = vsel %vm550, %v608, 0
        %vm614 = vcmask 1043456
        %v616 = vsel %vm614, %v610, 0
        %618 = vmatprep.subr.bf16.mxu0 0
        %619 = vmatpush1.bf16.msra.mxu0 %v616
        %620 = vmatprep.subr.bf16.mxu0 0
        %621 = vmatpush1.bf16.msra.mxu0 0
        %622 = vmatprep.subr.bf16.mxu0 0
        %623 = vmatpush1.bf16.msra.mxu0 0
        %624 = vmatprep.subr.bf16.mxu0 0
        %625 = vmatpush1.bf16.msra.mxu0 0
        %626 = vmatprep.subr.bf16.mxu0 0
        %627 = vmatpush1.bf16.msra.mxu0 0
        %628 = vmatprep.subr.bf16.mxu0 0
        %629 = vmatpush1.bf16.msra.mxu0 0
        %630 = vmatprep.subr.bf16.mxu0 0
        %631 = vmatpush1.bf16.msra.mxu0 0
        %632 = vmatprep.subr.bf16.mxu0 0
        %633 = vmatpush1.bf16.msra.mxu0 0
        %634 = vmatprep.subr.bf16.mxu0 0
        %635 = vmatpush1.bf16.msra.mxu0 0
        %636 = vmatprep.subr.bf16.mxu0 0
        %637 = vmatpush1.bf16.msra.mxu0 0
        %638 = vmatprep.subr.bf16.mxu0 0
        %639 = vmatpush1.bf16.msra.mxu0 0
        %640 = vmatprep.subr.bf16.mxu0 0
        %641 = vmatpush1.bf16.msra.mxu0 0
        %642 = vmatprep.subr.bf16.mxu0 0
        %643 = vmatpush1.bf16.msra.mxu0 0
        %644 = vmatprep.subr.bf16.mxu0 0
        %645 = vmatpush1.bf16.msra.mxu0 0
        %646 = vmatprep.subr.bf16.mxu0 0
        %647 = vmatpush1.bf16.msra.mxu0 0
        %648 = vmatprep.subr.bf16.mxu0 0
        %649 = vmatpush1.bf16.msra.mxu0 0
        %650 = vmatprep.mubr.bf16.mxu0 0
        %651 = vmatmul.mubr.bf16.gmra.mrb[0].mxu0 %v612
        %v652 = vpop.f32.mrb[0].mxu0
        %v653 = vadd.f32 0.0, %v652
        %v654 = vpop.f32.mrb[0].mxu0
        %v655 = vpop.f32.mrb[0].mxu0
        %v656 = vpop.f32.mrb[0].mxu0
        %657 = vdwg.mxu0
        %658 = vst.msk [vmem:[#allocation2] sm:$0xff] %vm550, %v653
        %660 = vrot.lane.b32.xlu0 %v539, 120
        %v661 = vpop.permute.xlu0 %660
        %662 = vrot.lane.b32.xlu0 %v540, 88
        %v663 = vpop.permute.xlu0 %662
        %v665 = vsel %vm550, %v661, 0
        %v668 = vsel %vm550, %v663, 0
        %670 = vmatprep.subr.bf16.mxu0 0
        %671 = vmatpush1.bf16.xpose.msra.mxu0 %v668
        %672 = vmatprep.subr.bf16.mxu0 0
        %673 = vmatpush1.bf16.xpose.msra.mxu0 0
        %674 = vmatprep.subr.bf16.mxu0 0
        %675 = vmatpush1.bf16.xpose.msra.mxu0 0
        %676 = vmatprep.subr.bf16.mxu0 0
        %677 = vmatpush1.bf16.xpose.msra.mxu0 0
        %678 = vmatprep.subr.bf16.mxu0 0
        %679 = vmatpush1.bf16.xpose.msra.mxu0 0
        %680 = vmatprep.subr.bf16.mxu0 0
        %681 = vmatpush1.bf16.xpose.msra.mxu0 0
        %682 = vmatprep.subr.bf16.mxu0 0
        %683 = vmatpush1.bf16.xpose.msra.mxu0 0
        %684 = vmatprep.subr.bf16.mxu0 0
        %685 = vmatpush1.bf16.xpose.msra.mxu0 0
        %686 = vmatprep.subr.bf16.mxu0 0
        %687 = vmatpush1.bf16.xpose.msra.mxu0 0
        %688 = vmatprep.subr.bf16.mxu0 0
        %689 = vmatpush1.bf16.xpose.msra.mxu0 0
        %690 = vmatprep.subr.bf16.mxu0 0
        %691 = vmatpush1.bf16.xpose.msra.mxu0 0
        %692 = vmatprep.subr.bf16.mxu0 0
        %693 = vmatpush1.bf16.xpose.msra.mxu0 0
        %694 = vmatprep.subr.bf16.mxu0 0
        %695 = vmatpush1.bf16.xpose.msra.mxu0 0
        %696 = vmatprep.subr.bf16.mxu0 0
        %697 = vmatpush1.bf16.xpose.msra.mxu0 0
        %698 = vmatprep.subr.bf16.mxu0 0
        %699 = vmatpush1.bf16.xpose.msra.mxu0 0
        %700 = vmatprep.subr.bf16.mxu0 0
        %701 = vmatpush1.bf16.xpose.msra.mxu0 0
        %702 = vmatprep.mubr.bf16.mxu0 0
        %703 = vmatmul.mubr.bf16.gmra.mrb[0].mxu0 %v665
        %v704 = vpop.f32.mrb[0].mxu0
        %v705 = vadd.f32 %v545, %v704
        %v706 = vpop.f32.mrb[0].mxu0
        %v707 = vpop.f32.mrb[0].mxu0
        %v708 = vpop.f32.mrb[0].mxu0
        %709 = vdwg.mxu0
        %v710 = vsel %vm550, %v705, -inf
        %711 = vmax.xlane.f32.xlu0 %v710
        %v712 = vpop.xlane.xlu0 %711
        %v713 = vsub.f32 %v705, %v712
        %v714 = vmul.f32 %v713, 1.442695
        %v715 = vpow.pop %v714
        %v716 = vsel %vm550, %v715, 0.0
        %717 = vadd.xlane.f32.xlu0 %v716
        %v718 = vpop.xlane.xlu0 %717
        %v719 = vrcp.pop %v718
        %v720 = vmul.f32 %v715, %v719
        %v721 = vpack.c.bf16 %v720, %v720
        %722 = vrot.lane.b32.xlu0 %v540, 56
        %v723 = vpop.permute.xlu0 %722
        %v725 = vsel %vm550, %v721, 0
        %v728 = vsel %vm614, %v723, 0
        %730 = vmatprep.subr.bf16.mxu0 0
        %731 = vmatpush1.bf16.msra.mxu0 %v728
        %732 = vmatprep.subr.bf16.mxu0 0
        %733 = vmatpush1.bf16.msra.mxu0 0
        %734 = vmatprep.subr.bf16.mxu0 0
        %735 = vmatpush1.bf16.msra.mxu0 0
        %736 = vmatprep.subr.bf16.mxu0 0
        %737 = vmatpush1.bf16.msra.mxu0 0
        %738 = vmatprep.subr.bf16.mxu0 0
        %739 = vmatpush1.bf16.msra.mxu0 0
        %740 = vmatprep.subr.bf16.mxu0 0
        %741 = vmatpush1.bf16.msra.mxu0 0
        %742 = vmatprep.subr.bf16.mxu0 0
        %743 = vmatpush1.bf16.msra.mxu0 0
        %744 = vmatprep.subr.bf16.mxu0 0
        %745 = vmatpush1.bf16.msra.mxu0 0
        %746 = vmatprep.subr.bf16.mxu0 0
        %747 = vmatpush1.bf16.msra.mxu0 0
        %748 = vmatprep.subr.bf16.mxu0 0
        %749 = vmatpush1.bf16.msra.mxu0 0
        %750 = vmatprep.subr.bf16.mxu0 0
        %751 = vmatpush1.bf16.msra.mxu0 0
        %752 = vmatprep.subr.bf16.mxu0 0
        %753 = vmatpush1.bf16.msra.mxu0 0
        %754 = vmatprep.subr.bf16.mxu0 0
        %755 = vmatpush1.bf16.msra.mxu0 0
        %756 = vmatprep.subr.bf16.mxu0 0
        %757 = vmatpush1.bf16.msra.mxu0 0
        %758 = vmatprep.subr.bf16.mxu0 0
        %759 = vmatpush1.bf16.msra.mxu0 0
        %760 = vmatprep.subr.bf16.mxu0 0
        %761 = vmatpush1.bf16.msra.mxu0 0
        %762 = vmatprep.mubr.bf16.mxu0 0
        %763 = vmatmul.mubr.bf16.gmra.mrb[0].mxu0 %v725
        %v764 = vpop.f32.mrb[0].mxu0
        %v765 = vadd.f32 0.0, %v764
        %v766 = vpop.f32.mrb[0].mxu0
        %v767 = vpop.f32.mrb[0].mxu0
        %v768 = vpop.f32.mrb[0].mxu0
        %769 = vdwg.mxu0
        %771 = vrot.lane.b32.xlu0 %v765, 8
        %v772 = vpop.permute.xlu0 %771
        %vm774 = vcmask 130112
        %775 = vst.msk [vmem:[#allocation2] sm:$0xff] %vm774, %v772
        %776 = vrot.lane.b32.xlu0 %v539, 112
        %v777 = vpop.permute.xlu0 %776
        %778 = vrot.lane.b32.xlu0 %v540, 80
        %v779 = vpop.permute.xlu0 %778
        %v781 = vsel %vm550, %v777, 0
        %v784 = vsel %vm550, %v779, 0
        %786 = vmatprep.subr.bf16.mxu0 0
        %787 = vmatpush1.bf16.xpose.msra.mxu0 %v784
        %788 = vmatprep.subr.bf16.mxu0 0
        %789 = vmatpush1.bf16.xpose.msra.mxu0 0
        %790 = vmatprep.subr.bf16.mxu0 0
        %791 = vmatpush1.bf16.xpose.msra.mxu0 0
        %792 = vmatprep.subr.bf16.mxu0 0
        %793 = vmatpush1.bf16.xpose.msra.mxu0 0
        %794 = vmatprep.subr.bf16.mxu0 0
        %795 = vmatpush1.bf16.xpose.msra.mxu0 0
        %796 = vmatprep.subr.bf16.mxu0 0
        %797 = vmatpush1.bf16.xpose.msra.mxu0 0
        %798 = vmatprep.subr.bf16.mxu0 0
        %799 = vmatpush1.bf16.xpose.msra.mxu0 0
        %800 = vmatprep.subr.bf16.mxu0 0
        %801 = vmatpush1.bf16.xpose.msra.mxu0 0
        %802 = vmatprep.subr.bf16.mxu0 0
        %803 = vmatpush1.bf16.xpose.msra.mxu0 0
        %804 = vmatprep.subr.bf16.mxu0 0
        %805 = vmatpush1.bf16.xpose.msra.mxu0 0
        %806 = vmatprep.subr.bf16.mxu0 0
        %807 = vmatpush1.bf16.xpose.msra.mxu0 0
        %808 = vmatprep.subr.bf16.mxu0 0
        %809 = vmatpush1.bf16.xpose.msra.mxu0 0
        %810 = vmatprep.subr.bf16.mxu0 0
        %811 = vmatpush1.bf16.xpose.msra.mxu0 0
        %812 = vmatprep.subr.bf16.mxu0 0
        %813 = vmatpush1.bf16.xpose.msra.mxu0 0
        %814 = vmatprep.subr.bf16.mxu0 0
        %815 = vmatpush1.bf16.xpose.msra.mxu0 0
        %816 = vmatprep.subr.bf16.mxu0 0
        %817 = vmatpush1.bf16.xpose.msra.mxu0 0
        %818 = vmatprep.mubr.bf16.mxu0 0
        %819 = vmatmul.mubr.bf16.gmra.mrb[0].mxu0 %v781
        %v820 = vpop.f32.mrb[0].mxu0
        %v821 = vadd.f32 %v545, %v820
        %v822 = vpop.f32.mrb[0].mxu0
        %v823 = vpop.f32.mrb[0].mxu0
        %v824 = vpop.f32.mrb[0].mxu0
        %825 = vdwg.mxu0
        %v826 = vsel %vm550, %v821, -inf
        %827 = vmax.xlane.f32.xlu0 %v826
        %v828 = vpop.xlane.xlu0 %827
        %v829 = vsub.f32 %v821, %v828
        %v830 = vmul.f32 %v829, 1.442695
        %v831 = vpow.pop %v830
        %v832 = vsel %vm550, %v831, 0.0
        %833 = vadd.xlane.f32.xlu0 %v832
        %v834 = vpop.xlane.xlu0 %833
        %v835 = vrcp.pop %v834
        %v836 = vmul.f32 %v831, %v835
        %v837 = vpack.c.bf16 %v836, %v836
        %838 = vrot.lane.b32.xlu0 %v540, 48
        %v839 = vpop.permute.xlu0 %838
        %v841 = vsel %vm550, %v837, 0
        %v844 = vsel %vm614, %v839, 0
        %846 = vmatprep.subr.bf16.mxu0 0
        %847 = vmatpush1.bf16.msra.mxu0 %v844
        %848 = vmatprep.subr.bf16.mxu0 0
        %849 = vmatpush1.bf16.msra.mxu0 0
        %850 = vmatprep.subr.bf16.mxu0 0
        %851 = vmatpush1.bf16.msra.mxu0 0
        %852 = vmatprep.subr.bf16.mxu0 0
        %853 = vmatpush1.bf16.msra.mxu0 0
        %854 = vmatprep.subr.bf16.mxu0 0
        %855 = vmatpush1.bf16.msra.mxu0 0
        %856 = vmatprep.subr.bf16.mxu0 0
        %857 = vmatpush1.bf16.msra.mxu0 0
        %858 = vmatprep.subr.bf16.mxu0 0
        %859 = vmatpush1.bf16.msra.mxu0 0
        %860 = vmatprep.subr.bf16.mxu0 0
        %861 = vmatpush1.bf16.msra.mxu0 0
        %862 = vmatprep.subr.bf16.mxu0 0
        %863 = vmatpush1.bf16.msra.mxu0 0
        %864 = vmatprep.subr.bf16.mxu0 0
        %865 = vmatpush1.bf16.msra.mxu0 0
        %866 = vmatprep.subr.bf16.mxu0 0
        %867 = vmatpush1.bf16.msra.mxu0 0
        %868 = vmatprep.subr.bf16.mxu0 0
        %869 = vmatpush1.bf16.msra.mxu0 0
        %870 = vmatprep.subr.bf16.mxu0 0
        %871 = vmatpush1.bf16.msra.mxu0 0
        %872 = vmatprep.subr.bf16.mxu0 0
        %873 = vmatpush1.bf16.msra.mxu0 0
        %874 = vmatprep.subr.bf16.mxu0 0
        %875 = vmatpush1.bf16.msra.mxu0 0
        %876 = vmatprep.subr.bf16.mxu0 0
        %877 = vmatpush1.bf16.msra.mxu0 0
        %878 = vmatprep.mubr.bf16.mxu0 0
        %879 = vmatmul.mubr.bf16.gmra.mrb[0].mxu0 %v841
        %v880 = vpop.f32.mrb[0].mxu0
        %v881 = vadd.f32 0.0, %v880
        %v882 = vpop.f32.mrb[0].mxu0
        %v883 = vpop.f32.mrb[0].mxu0
        %v884 = vpop.f32.mrb[0].mxu0
        %885 = vdwg.mxu0
        %887 = vrot.lane.b32.xlu0 %v881, 16
        %v888 = vpop.permute.xlu0 %887
        %vm890 = vcmask 195712
        %891 = vst.msk [vmem:[#allocation2] sm:$0xff] %vm890, %v888
        %892 = vrot.lane.b32.xlu0 %v539, 104
        %v893 = vpop.permute.xlu0 %892
        %894 = vrot.lane.b32.xlu0 %v540, 72
        %v895 = vpop.permute.xlu0 %894
        %v897 = vsel %vm550, %v893, 0
        %v900 = vsel %vm550, %v895, 0
        %902 = vmatprep.subr.bf16.mxu0 0
        %903 = vmatpush1.bf16.xpose.msra.mxu0 %v900
        %904 = vmatprep.subr.bf16.mxu0 0
        %905 = vmatpush1.bf16.xpose.msra.mxu0 0
        %906 = vmatprep.subr.bf16.mxu0 0
        %907 = vmatpush1.bf16.xpose.msra.mxu0 0
        %908 = vmatprep.subr.bf16.mxu0 0
        %909 = vmatpush1.bf16.xpose.msra.mxu0 0
        %910 = vmatprep.subr.bf16.mxu0 0
        %911 = vmatpush1.bf16.xpose.msra.mxu0 0
        %912 = vmatprep.subr.bf16.mxu0 0
        %913 = vmatpush1.bf16.xpose.msra.mxu0 0
        %914 = vmatprep.subr.bf16.mxu0 0
        %915 = vmatpush1.bf16.xpose.msra.mxu0 0
        %916 = vmatprep.subr.bf16.mxu0 0
        %917 = vmatpush1.bf16.xpose.msra.mxu0 0
        %918 = vmatprep.subr.bf16.mxu0 0
        %919 = vmatpush1.bf16.xpose.msra.mxu0 0
        %920 = vmatprep.subr.bf16.mxu0 0
        %921 = vmatpush1.bf16.xpose.msra.mxu0 0
        %922 = vmatprep.subr.bf16.mxu0 0
        %923 = vmatpush1.bf16.xpose.msra.mxu0 0
        %924 = vmatprep.subr.bf16.mxu0 0
        %925 = vmatpush1.bf16.xpose.msra.mxu0 0
        %926 = vmatprep.subr.bf16.mxu0 0
        %927 = vmatpush1.bf16.xpose.msra.mxu0 0
        %928 = vmatprep.subr.bf16.mxu0 0
        %929 = vmatpush1.bf16.xpose.msra.mxu0 0
        %930 = vmatprep.subr.bf16.mxu0 0
        %931 = vmatpush1.bf16.xpose.msra.mxu0 0
        %932 = vmatprep.subr.bf16.mxu0 0
        %933 = vmatpush1.bf16.xpose.msra.mxu0 0
        %934 = vmatprep.mubr.bf16.mxu0 0
        %935 = vmatmul.mubr.bf16.gmra.mrb[0].mxu0 %v897
        %v936 = vpop.f32.mrb[0].mxu0
        %v937 = vadd.f32 %v545, %v936
        %v938 = vpop.f32.mrb[0].mxu0
        %v939 = vpop.f32.mrb[0].mxu0
        %v940 = vpop.f32.mrb[0].mxu0
        %941 = vdwg.mxu0
        %v942 = vsel %vm550, %v937, -inf
        %943 = vmax.xlane.f32.xlu0 %v942
        %v944 = vpop.xlane.xlu0 %943
        %v945 = vsub.f32 %v937, %v944
        %v946 = vmul.f32 %v945, 1.442695
        %v947 = vpow.pop %v946
        %v948 = vsel %vm550, %v947, 0.0
        %949 = vadd.xlane.f32.xlu0 %v948
        %v950 = vpop.xlane.xlu0 %949
        %v951 = vrcp.pop %v950
        %v952 = vmul.f32 %v947, %v951
        %v953 = vpack.c.bf16 %v952, %v952
        %954 = vrot.lane.b32.xlu0 %v540, 40
        %v955 = vpop.permute.xlu0 %954
        %v957 = vsel %vm550, %v953, 0
        %v960 = vsel %vm614, %v955, 0
        %962 = vmatprep.subr.bf16.mxu0 0
        %963 = vmatpush1.bf16.msra.mxu0 %v960
        %964 = vmatprep.subr.bf16.mxu0 0
        %965 = vmatpush1.bf16.msra.mxu0 0
        %966 = vmatprep.subr.bf16.mxu0 0
        %967 = vmatpush1.bf16.msra.mxu0 0
        %968 = vmatprep.subr.bf16.mxu0 0
        %969 = vmatpush1.bf16.msra.mxu0 0
        %970 = vmatprep.subr.bf16.mxu0 0
        %971 = vmatpush1.bf16.msra.mxu0 0
        %972 = vmatprep.subr.bf16.mxu0 0
        %973 = vmatpush1.bf16.msra.mxu0 0
        %974 = vmatprep.subr.bf16.mxu0 0
        %975 = vmatpush1.bf16.msra.mxu0 0
        %976 = vmatprep.subr.bf16.mxu0 0
        %977 = vmatpush1.bf16.msra.mxu0 0
        %978 = vmatprep.subr.bf16.mxu0 0
        %979 = vmatpush1.bf16.msra.mxu0 0
        %980 = vmatprep.subr.bf16.mxu0 0
        %981 = vmatpush1.bf16.msra.mxu0 0
        %982 = vmatprep.subr.bf16.mxu0 0
        %983 = vmatpush1.bf16.msra.mxu0 0
        %984 = vmatprep.subr.bf16.mxu0 0
        %985 = vmatpush1.bf16.msra.mxu0 0
        %986 = vmatprep.subr.bf16.mxu0 0
        %987 = vmatpush1.bf16.msra.mxu0 0
        %988 = vmatprep.subr.bf16.mxu0 0
        %989 = vmatpush1.bf16.msra.mxu0 0
        %990 = vmatprep.subr.bf16.mxu0 0
        %991 = vmatpush1.bf16.msra.mxu0 0
        %992 = vmatprep.subr.bf16.mxu0 0
        %993 = vmatpush1.bf16.msra.mxu0 0
        %994 = vmatprep.mubr.bf16.mxu0 0
        %995 = vmatmul.mubr.bf16.gmra.mrb[0].mxu0 %v957
        %v996 = vpop.f32.mrb[0].mxu0
        %v997 = vadd.f32 0.0, %v996
        %v998 = vpop.f32.mrb[0].mxu0
        %v999 = vpop.f32.mrb[0].mxu0
        %v1000 = vpop.f32.mrb[0].mxu0
        %1001 = vdwg.mxu0
        %1003 = vrot.lane.b32.xlu0 %v997, 24
        %v1004 = vpop.permute.xlu0 %1003
        %vm1006 = vcmask 261312
        %1007 = vst.msk [vmem:[#allocation2] sm:$0xff] %vm1006, %v1004
        %1008 = vst.msk [vmem:[%s459] sm:$0xff] %vm550, %v607
        %1009 = vst.msk [vmem:[%s459 + $0x8] sm:$0xff] %vm550, %v720
        %1010 = vst.msk [vmem:[%s459 + $0x10] sm:$0xff] %vm550, %v836
        %1011 = vst.msk [vmem:[%s459 + $0x18] sm:$0xff] %vm550, %v952
        %s1012 = scalar_lea.vmem %s469, 1
        %v1013 = vld [vmem:[%s1012] sm:$0x1]
        %vm1014 = vcmp.eq.f32.partialorder %v1013, 0.0
        %v1015 = vsel %vm1014, -1000.0, 0.0
        %v1016 = vmul.f32 %v532, 0.35355338
        %v1017 = vpack.c.bf16 %v1016, %v1016
        %v1018 = vpack.c.bf16 %v532, %v532
        %v1020 = vlaneseq
        %v1021 = vshrl.u32 %v1020, 7
        %v1022 = vsub.s32 0, %v1021
        %v1023 = vrot.slane %v1015, %v1022
        %1026 = vrot.lane.b32.xlu0 %v1018, 96
        %v1027 = vpop.permute.xlu0 %1026
        %v1029 = vsel %vm550, %v1017, 0
        %v1032 = vsel %vm550, %v1027, 0
        %1034 = vmatprep.subr.bf16.mxu0 0
        %1035 = vmatpush1.bf16.xpose.msra.mxu0 %v1032
        %1036 = vmatprep.subr.bf16.mxu0 0
        %1037 = vmatpush1.bf16.xpose.msra.mxu0 0
        %1038 = vmatprep.subr.bf16.mxu0 0
        %1039 = vmatpush1.bf16.xpose.msra.mxu0 0
        %1040 = vmatprep.subr.bf16.mxu0 0
        %1041 = vmatpush1.bf16.xpose.msra.mxu0 0
        %1042 = vmatprep.subr.bf16.mxu0 0
        %1043 = vmatpush1.bf16.xpose.msra.mxu0 0
        %1044 = vmatprep.subr.bf16.mxu0 0
        %1045 = vmatpush1.bf16.xpose.msra.mxu0 0
        %1046 = vmatprep.subr.bf16.mxu0 0
        %1047 = vmatpush1.bf16.xpose.msra.mxu0 0
        %1048 = vmatprep.subr.bf16.mxu0 0
        %1049 = vmatpush1.bf16.xpose.msra.mxu0 0
        %1050 = vmatprep.subr.bf16.mxu0 0
        %1051 = vmatpush1.bf16.xpose.msra.mxu0 0
        %1052 = vmatprep.subr.bf16.mxu0 0
        %1053 = vmatpush1.bf16.xpose.msra.mxu0 0
        %1054 = vmatprep.subr.bf16.mxu0 0
        %1055 = vmatpush1.bf16.xpose.msra.mxu0 0
        %1056 = vmatprep.subr.bf16.mxu0 0
        %1057 = vmatpush1.bf16.xpose.msra.mxu0 0
        %1058 = vmatprep.subr.bf16.mxu0 0
        %1059 = vmatpush1.bf16.xpose.msra.mxu0 0
        %1060 = vmatprep.subr.bf16.mxu0 0
        %1061 = vmatpush1.bf16.xpose.msra.mxu0 0
        %1062 = vmatprep.subr.bf16.mxu0 0
        %1063 = vmatpush1.bf16.xpose.msra.mxu0 0
        %1064 = vmatprep.subr.bf16.mxu0 0
        %1065 = vmatpush1.bf16.xpose.msra.mxu0 0
        %1066 = vmatprep.mubr.bf16.mxu0 0
        %1067 = vmatmul.mubr.bf16.gmra.mrb[0].mxu0 %v1029
        %v1068 = vpop.f32.mrb[0].mxu0
        %v1069 = vadd.f32 %v1023, %v1068
        %v1070 = vpop.f32.mrb[0].mxu0
        %v1071 = vpop.f32.mrb[0].mxu0
        %v1072 = vpop.f32.mrb[0].mxu0
        %1073 = vdwg.mxu0
        %v1074 = vsel %vm550, %v1069, -inf
        %1075 = vmax.xlane.f32.xlu0 %v1074
        %v1076 = vpop.xlane.xlu0 %1075
        %v1077 = vsub.f32 %v1069, %v1076
        %v1078 = vmul.f32 %v1077, 1.442695
        %v1079 = vpow.pop %v1078
        %v1080 = vsel %vm550, %v1079, 0.0
        %1081 = vadd.xlane.f32.xlu0 %v1080
        %v1082 = vpop.xlane.xlu0 %1081
        %v1083 = vrcp.pop %v1082
        %v1084 = vmul.f32 %v1079, %v1083
        %v1085 = vpack.c.bf16 %v1084, %v1084
        %1086 = vrot.lane.b32.xlu0 %v1018, 64
        %v1087 = vpop.permute.xlu0 %1086
        %v1089 = vsel %vm550, %v1085, 0
        %v1092 = vsel %vm614, %v1087, 0
        %1094 = vmatprep.subr.bf16.mxu0 0
        %1095 = vmatpush1.bf16.msra.mxu0 %v1092
        %1096 = vmatprep.subr.bf16.mxu0 0
        %1097 = vmatpush1.bf16.msra.mxu0 0
        %1098 = vmatprep.subr.bf16.mxu0 0
        %1099 = vmatpush1.bf16.msra.mxu0 0
        %1100 = vmatprep.subr.bf16.mxu0 0
        %1101 = vmatpush1.bf16.msra.mxu0 0
        %1102 = vmatprep.subr.bf16.mxu0 0
        %1103 = vmatpush1.bf16.msra.mxu0 0
        %1104 = vmatprep.subr.bf16.mxu0 0
        %1105 = vmatpush1.bf16.msra.mxu0 0
        %1106 = vmatprep.subr.bf16.mxu0 0
        %1107 = vmatpush1.bf16.msra.mxu0 0
        %1108 = vmatprep.subr.bf16.mxu0 0
        %1109 = vmatpush1.bf16.msra.mxu0 0
        %1110 = vmatprep.subr.bf16.mxu0 0
        %1111 = vmatpush1.bf16.msra.mxu0 0
        %1112 = vmatprep.subr.bf16.mxu0 0
        %1113 = vmatpush1.bf16.msra.mxu0 0
        %1114 = vmatprep.subr.bf16.mxu0 0
        %1115 = vmatpush1.bf16.msra.mxu0 0
        %1116 = vmatprep.subr.bf16.mxu0 0
        %1117 = vmatpush1.bf16.msra.mxu0 0
        %1118 = vmatprep.subr.bf16.mxu0 0
        %1119 = vmatpush1.bf16.msra.mxu0 0
        %1120 = vmatprep.subr.bf16.mxu0 0
        %1121 = vmatpush1.bf16.msra.mxu0 0
        %1122 = vmatprep.subr.bf16.mxu0 0
        %1123 = vmatpush1.bf16.msra.mxu0 0
        %1124 = vmatprep.subr.bf16.mxu0 0
        %1125 = vmatpush1.bf16.msra.mxu0 0
        %1126 = vmatprep.mubr.bf16.mxu0 0
        %1127 = vmatmul.mubr.bf16.gmra.mrb[0].mxu0 %v1089
        %v1128 = vpop.f32.mrb[0].mxu0
        %v1129 = vadd.f32 0.0, %v1128
        %v1130 = vpop.f32.mrb[0].mxu0
        %v1131 = vpop.f32.mrb[0].mxu0
        %v1132 = vpop.f32.mrb[0].mxu0
        %1133 = vdwg.mxu0
        %1134 = vst.msk [vmem:[#allocation2 + $0x8] sm:$0xff] %vm550, %v1129
        %1136 = vrot.lane.b32.xlu0 %v1017, 120
        %v1137 = vpop.permute.xlu0 %1136
        %1138 = vrot.lane.b32.xlu0 %v1018, 88
        %v1139 = vpop.permute.xlu0 %1138
        %v1141 = vsel %vm550, %v1137, 0
        %v1144 = vsel %vm550, %v1139, 0
        %1146 = vmatprep.subr.bf16.mxu0 0
        %1147 = vmatpush1.bf16.xpose.msra.mxu0 %v1144
        %1148 = vmatprep.subr.bf16.mxu0 0
        %1149 = vmatpush1.bf16.xpose.msra.mxu0 0
        %1150 = vmatprep.subr.bf16.mxu0 0
        %1151 = vmatpush1.bf16.xpose.msra.mxu0 0
        %1152 = vmatprep.subr.bf16.mxu0 0
        %1153 = vmatpush1.bf16.xpose.msra.mxu0 0
        %1154 = vmatprep.subr.bf16.mxu0 0
        %1155 = vmatpush1.bf16.xpose.msra.mxu0 0
        %1156 = vmatprep.subr.bf16.mxu0 0
        %1157 = vmatpush1.bf16.xpose.msra.mxu0 0
        %1158 = vmatprep.subr.bf16.mxu0 0
        %1159 = vmatpush1.bf16.xpose.msra.mxu0 0
        %1160 = vmatprep.subr.bf16.mxu0 0
        %1161 = vmatpush1.bf16.xpose.msra.mxu0 0
        %1162 = vmatprep.subr.bf16.mxu0 0
        %1163 = vmatpush1.bf16.xpose.msra.mxu0 0
        %1164 = vmatprep.subr.bf16.mxu0 0
        %1165 = vmatpush1.bf16.xpose.msra.mxu0 0
        %1166 = vmatprep.subr.bf16.mxu0 0
        %1167 = vmatpush1.bf16.xpose.msra.mxu0 0
        %1168 = vmatprep.subr.bf16.mxu0 0
        %1169 = vmatpush1.bf16.xpose.msra.mxu0 0
        %1170 = vmatprep.subr.bf16.mxu0 0
        %1171 = vmatpush1.bf16.xpose.msra.mxu0 0
        %1172 = vmatprep.subr.bf16.mxu0 0
        %1173 = vmatpush1.bf16.xpose.msra.mxu0 0
        %1174 = vmatprep.subr.bf16.mxu0 0
        %1175 = vmatpush1.bf16.xpose.msra.mxu0 0
        %1176 = vmatprep.subr.bf16.mxu0 0
        %1177 = vmatpush1.bf16.xpose.msra.mxu0 0
        %1178 = vmatprep.mubr.bf16.mxu0 0
        %1179 = vmatmul.mubr.bf16.gmra.mrb[0].mxu0 %v1141
        %v1180 = vpop.f32.mrb[0].mxu0
        %v1181 = vadd.f32 %v1023, %v1180
        %v1182 = vpop.f32.mrb[0].mxu0
        %v1183 = vpop.f32.mrb[0].mxu0
        %v1184 = vpop.f32.mrb[0].mxu0
        %1185 = vdwg.mxu0
        %v1186 = vsel %vm550, %v1181, -inf
        %1187 = vmax.xlane.f32.xlu0 %v1186
        %v1188 = vpop.xlane.xlu0 %1187
        %v1189 = vsub.f32 %v1181, %v1188
        %v1190 = vmul.f32 %v1189, 1.442695
        %v1191 = vpow.pop %v1190
        %v1192 = vsel %vm550, %v1191, 0.0
        %1193 = vadd.xlane.f32.xlu0 %v1192
        %v1194 = vpop.xlane.xlu0 %1193
        %v1195 = vrcp.pop %v1194
        %v1196 = vmul.f32 %v1191, %v1195
        %v1197 = vpack.c.bf16 %v1196, %v1196
        %1198 = vrot.lane.b32.xlu0 %v1018, 56
        %v1199 = vpop.permute.xlu0 %1198
        %v1201 = vsel %vm550, %v1197, 0
        %v1204 = vsel %vm614, %v1199, 0
        %1206 = vmatprep.subr.bf16.mxu0 0
        %1207 = vmatpush1.bf16.msra.mxu0 %v1204
        %1208 = vmatprep.subr.bf16.mxu0 0
        %1209 = vmatpush1.bf16.msra.mxu0 0
        %1210 = vmatprep.subr.bf16.mxu0 0
        %1211 = vmatpush1.bf16.msra.mxu0 0
        %1212 = vmatprep.subr.bf16.mxu0 0
        %1213 = vmatpush1.bf16.msra.mxu0 0
        %1214 = vmatprep.subr.bf16.mxu0 0
        %1215 = vmatpush1.bf16.msra.mxu0 0
        %1216 = vmatprep.subr.bf16.mxu0 0
        %1217 = vmatpush1.bf16.msra.mxu0 0
        %1218 = vmatprep.subr.bf16.mxu0 0
        %1219 = vmatpush1.bf16.msra.mxu0 0
        %1220 = vmatprep.subr.bf16.mxu0 0
        %1221 = vmatpush1.bf16.msra.mxu0 0
        %1222 = vmatprep.subr.bf16.mxu0 0
        %1223 = vmatpush1.bf16.msra.mxu0 0
        %1224 = vmatprep.subr.bf16.mxu0 0
        %1225 = vmatpush1.bf16.msra.mxu0 0
        %1226 = vmatprep.subr.bf16.mxu0 0
        %1227 = vmatpush1.bf16.msra.mxu0 0
        %1228 = vmatprep.subr.bf16.mxu0 0
        %1229 = vmatpush1.bf16.msra.mxu0 0
        %1230 = vmatprep.subr.bf16.mxu0 0
        %1231 = vmatpush1.bf16.msra.mxu0 0
        %1232 = vmatprep.subr.bf16.mxu0 0
        %1233 = vmatpush1.bf16.msra.mxu0 0
        %1234 = vmatprep.subr.bf16.mxu0 0
        %1235 = vmatpush1.bf16.msra.mxu0 0
        %1236 = vmatprep.subr.bf16.mxu0 0
        %1237 = vmatpush1.bf16.msra.mxu0 0
        %1238 = vmatprep.mubr.bf16.mxu0 0
        %1239 = vmatmul.mubr.bf16.gmra.mrb[0].mxu0 %v1201
        %v1240 = vpop.f32.mrb[0].mxu0
        %v1241 = vadd.f32 0.0, %v1240
        %v1242 = vpop.f32.mrb[0].mxu0
        %v1243 = vpop.f32.mrb[0].mxu0
        %v1244 = vpop.f32.mrb[0].mxu0
        %1245 = vdwg.mxu0
        %1247 = vrot.lane.b32.xlu0 %v1241, 8
        %v1248 = vpop.permute.xlu0 %1247
        %1250 = vst.msk [vmem:[#allocation2 + $0x8] sm:$0xff] %vm774, %v1248
        %1251 = vrot.lane.b32.xlu0 %v1017, 112
        %v1252 = vpop.permute.xlu0 %1251
        %1253 = vrot.lane.b32.xlu0 %v1018, 80
        %v1254 = vpop.permute.xlu0 %1253
        %v1256 = vsel %vm550, %v1252, 0
        %v1259 = vsel %vm550, %v1254, 0
        %1261 = vmatprep.subr.bf16.mxu0 0
        %1262 = vmatpush1.bf16.xpose.msra.mxu0 %v1259
        %1263 = vmatprep.subr.bf16.mxu0 0
        %1264 = vmatpush1.bf16.xpose.msra.mxu0 0
        %1265 = vmatprep.subr.bf16.mxu0 0
        %1266 = vmatpush1.bf16.xpose.msra.mxu0 0
        %1267 = vmatprep.subr.bf16.mxu0 0
        %1268 = vmatpush1.bf16.xpose.msra.mxu0 0
        %1269 = vmatprep.subr.bf16.mxu0 0
        %1270 = vmatpush1.bf16.xpose.msra.mxu0 0
        %1271 = vmatprep.subr.bf16.mxu0 0
        %1272 = vmatpush1.bf16.xpose.msra.mxu0 0
        %1273 = vmatprep.subr.bf16.mxu0 0
        %1274 = vmatpush1.bf16.xpose.msra.mxu0 0
        %1275 = vmatprep.subr.bf16.mxu0 0
        %1276 = vmatpush1.bf16.xpose.msra.mxu0 0
        %1277 = vmatprep.subr.bf16.mxu0 0
        %1278 = vmatpush1.bf16.xpose.msra.mxu0 0
        %1279 = vmatprep.subr.bf16.mxu0 0
        %1280 = vmatpush1.bf16.xpose.msra.mxu0 0
        %1281 = vmatprep.subr.bf16.mxu0 0
        %1282 = vmatpush1.bf16.xpose.msra.mxu0 0
        %1283 = vmatprep.subr.bf16.mxu0 0
        %1284 = vmatpush1.bf16.xpose.msra.mxu0 0
        %1285 = vmatprep.subr.bf16.mxu0 0
        %1286 = vmatpush1.bf16.xpose.msra.mxu0 0
        %1287 = vmatprep.subr.bf16.mxu0 0
        %1288 = vmatpush1.bf16.xpose.msra.mxu0 0
        %1289 = vmatprep.subr.bf16.mxu0 0
        %1290 = vmatpush1.bf16.xpose.msra.mxu0 0
        %1291 = vmatprep.subr.bf16.mxu0 0
        %1292 = vmatpush1.bf16.xpose.msra.mxu0 0
        %1293 = vmatprep.mubr.bf16.mxu0 0
        %1294 = vmatmul.mubr.bf16.gmra.mrb[0].mxu0 %v1256
        %v1295 = vpop.f32.mrb[0].mxu0
        %v1296 = vadd.f32 %v1023, %v1295
        %v1297 = vpop.f32.mrb[0].mxu0
        %v1298 = vpop.f32.mrb[0].mxu0
        %v1299 = vpop.f32.mrb[0].mxu0
        %1300 = vdwg.mxu0
        %v1301 = vsel %vm550, %v1296, -inf
        %1302 = vmax.xlane.f32.xlu0 %v1301
        %v1303 = vpop.xlane.xlu0 %1302
        %v1304 = vsub.f32 %v1296, %v1303
        %v1305 = vmul.f32 %v1304, 1.442695
        %v1306 = vpow.pop %v1305
        %v1307 = vsel %vm550, %v1306, 0.0
        %1308 = vadd.xlane.f32.xlu0 %v1307
        %v1309 = vpop.xlane.xlu0 %1308
        %v1310 = vrcp.pop %v1309
        %v1311 = vmul.f32 %v1306, %v1310
        %v1312 = vpack.c.bf16 %v1311, %v1311
        %1313 = vrot.lane.b32.xlu0 %v1018, 48
        %v1314 = vpop.permute.xlu0 %1313
        %v1316 = vsel %vm550, %v1312, 0
        %v1319 = vsel %vm614, %v1314, 0
        %1321 = vmatprep.subr.bf16.mxu0 0
        %1322 = vmatpush1.bf16.msra.mxu0 %v1319
        %1323 = vmatprep.subr.bf16.mxu0 0
        %1324 = vmatpush1.bf16.msra.mxu0 0
        %1325 = vmatprep.subr.bf16.mxu0 0
        %1326 = vmatpush1.bf16.msra.mxu0 0
        %1327 = vmatprep.subr.bf16.mxu0 0
        %1328 = vmatpush1.bf16.msra.mxu0 0
        %1329 = vmatprep.subr.bf16.mxu0 0
        %1330 = vmatpush1.bf16.msra.mxu0 0
        %1331 = vmatprep.subr.bf16.mxu0 0
        %1332 = vmatpush1.bf16.msra.mxu0 0
        %1333 = vmatprep.subr.bf16.mxu0 0
        %1334 = vmatpush1.bf16.msra.mxu0 0
        %1335 = vmatprep.subr.bf16.mxu0 0
        %1336 = vmatpush1.bf16.msra.mxu0 0
        %1337 = vmatprep.subr.bf16.mxu0 0
        %1338 = vmatpush1.bf16.msra.mxu0 0
        %1339 = vmatprep.subr.bf16.mxu0 0
        %1340 = vmatpush1.bf16.msra.mxu0 0
        %1341 = vmatprep.subr.bf16.mxu0 0
        %1342 = vmatpush1.bf16.msra.mxu0 0
        %1343 = vmatprep.subr.bf16.mxu0 0
        %1344 = vmatpush1.bf16.msra.mxu0 0
        %1345 = vmatprep.subr.bf16.mxu0 0
        %1346 = vmatpush1.bf16.msra.mxu0 0
        %1347 = vmatprep.subr.bf16.mxu0 0
        %1348 = vmatpush1.bf16.msra.mxu0 0
        %1349 = vmatprep.subr.bf16.mxu0 0
        %1350 = vmatpush1.bf16.msra.mxu0 0
        %1351 = vmatprep.subr.bf16.mxu0 0
        %1352 = vmatpush1.bf16.msra.mxu0 0
        %1353 = vmatprep.mubr.bf16.mxu0 0
        %1354 = vmatmul.mubr.bf16.gmra.mrb[0].mxu0 %v1316
        %v1355 = vpop.f32.mrb[0].mxu0
        %v1356 = vadd.f32 0.0, %v1355
        %v1357 = vpop.f32.mrb[0].mxu0
        %v1358 = vpop.f32.mrb[0].mxu0
        %v1359 = vpop.f32.mrb[0].mxu0
        %1360 = vdwg.mxu0
        %1362 = vrot.lane.b32.xlu0 %v1356, 16
        %v1363 = vpop.permute.xlu0 %1362
        %1365 = vst.msk [vmem:[#allocation2 + $0x8] sm:$0xff] %vm890, %v1363
        %1366 = vrot.lane.b32.xlu0 %v1017, 104
        %v1367 = vpop.permute.xlu0 %1366
        %1368 = vrot.lane.b32.xlu0 %v1018, 72
        %v1369 = vpop.permute.xlu0 %1368
        %v1371 = vsel %vm550, %v1367, 0
        %v1374 = vsel %vm550, %v1369, 0
        %1376 = vmatprep.subr.bf16.mxu0 0
        %1377 = vmatpush1.bf16.xpose.msra.mxu0 %v1374
        %1378 = vmatprep.subr.bf16.mxu0 0
        %1379 = vmatpush1.bf16.xpose.msra.mxu0 0
        %1380 = vmatprep.subr.bf16.mxu0 0
        %1381 = vmatpush1.bf16.xpose.msra.mxu0 0
        %1382 = vmatprep.subr.bf16.mxu0 0
        %1383 = vmatpush1.bf16.xpose.msra.mxu0 0
        %1384 = vmatprep.subr.bf16.mxu0 0
        %1385 = vmatpush1.bf16.xpose.msra.mxu0 0
        %1386 = vmatprep.subr.bf16.mxu0 0
        %1387 = vmatpush1.bf16.xpose.msra.mxu0 0
        %1388 = vmatprep.subr.bf16.mxu0 0
        %1389 = vmatpush1.bf16.xpose.msra.mxu0 0
        %1390 = vmatprep.subr.bf16.mxu0 0
        %1391 = vmatpush1.bf16.xpose.msra.mxu0 0
        %1392 = vmatprep.subr.bf16.mxu0 0
        %1393 = vmatpush1.bf16.xpose.msra.mxu0 0
        %1394 = vmatprep.subr.bf16.mxu0 0
        %1395 = vmatpush1.bf16.xpose.msra.mxu0 0
        %1396 = vmatprep.subr.bf16.mxu0 0
        %1397 = vmatpush1.bf16.xpose.msra.mxu0 0
        %1398 = vmatprep.subr.bf16.mxu0 0
        %1399 = vmatpush1.bf16.xpose.msra.mxu0 0
        %1400 = vmatprep.subr.bf16.mxu0 0
        %1401 = vmatpush1.bf16.xpose.msra.mxu0 0
        %1402 = vmatprep.subr.bf16.mxu0 0
        %1403 = vmatpush1.bf16.xpose.msra.mxu0 0
        %1404 = vmatprep.subr.bf16.mxu0 0
        %1405 = vmatpush1.bf16.xpose.msra.mxu0 0
        %1406 = vmatprep.subr.bf16.mxu0 0
        %1407 = vmatpush1.bf16.xpose.msra.mxu0 0
        %1408 = vmatprep.mubr.bf16.mxu0 0
        %1409 = vmatmul.mubr.bf16.gmra.mrb[0].mxu0 %v1371
        %v1410 = vpop.f32.mrb[0].mxu0
        %v1411 = vadd.f32 %v1023, %v1410
        %v1412 = vpop.f32.mrb[0].mxu0
        %v1413 = vpop.f32.mrb[0].mxu0
        %v1414 = vpop.f32.mrb[0].mxu0
        %1415 = vdwg.mxu0
        %v1416 = vsel %vm550, %v1411, -inf
        %1417 = vmax.xlane.f32.xlu0 %v1416
        %v1418 = vpop.xlane.xlu0 %1417
        %v1419 = vsub.f32 %v1411, %v1418
        %v1420 = vmul.f32 %v1419, 1.442695
        %v1421 = vpow.pop %v1420
        %v1422 = vsel %vm550, %v1421, 0.0
        %1423 = vadd.xlane.f32.xlu0 %v1422
        %v1424 = vpop.xlane.xlu0 %1423
        %v1425 = vrcp.pop %v1424
        %v1426 = vmul.f32 %v1421, %v1425
        %v1427 = vpack.c.bf16 %v1426, %v1426
        %1428 = vrot.lane.b32.xlu0 %v1018, 40
        %v1429 = vpop.permute.xlu0 %1428
        %v1431 = vsel %vm550, %v1427, 0
        %v1434 = vsel %vm614, %v1429, 0
        %1436 = vmatprep.subr.bf16.mxu0 0
        %1437 = vmatpush1.bf16.msra.mxu0 %v1434
        %1438 = vmatprep.subr.bf16.mxu0 0
        %1439 = vmatpush1.bf16.msra.mxu0 0
        %1440 = vmatprep.subr.bf16.mxu0 0
        %1441 = vmatpush1.bf16.msra.mxu0 0
        %1442 = vmatprep.subr.bf16.mxu0 0
        %1443 = vmatpush1.bf16.msra.mxu0 0
        %1444 = vmatprep.subr.bf16.mxu0 0
        %1445 = vmatpush1.bf16.msra.mxu0 0
        %1446 = vmatprep.subr.bf16.mxu0 0
        %1447 = vmatpush1.bf16.msra.mxu0 0
        %1448 = vmatprep.subr.bf16.mxu0 0
        %1449 = vmatpush1.bf16.msra.mxu0 0
        %1450 = vmatprep.subr.bf16.mxu0 0
        %1451 = vmatpush1.bf16.msra.mxu0 0
        %1452 = vmatprep.subr.bf16.mxu0 0
        %1453 = vmatpush1.bf16.msra.mxu0 0
        %1454 = vmatprep.subr.bf16.mxu0 0
        %1455 = vmatpush1.bf16.msra.mxu0 0
        %1456 = vmatprep.subr.bf16.mxu0 0
        %1457 = vmatpush1.bf16.msra.mxu0 0
        %1458 = vmatprep.subr.bf16.mxu0 0
        %1459 = vmatpush1.bf16.msra.mxu0 0
        %1460 = vmatprep.subr.bf16.mxu0 0
        %1461 = vmatpush1.bf16.msra.mxu0 0
        %1462 = vmatprep.subr.bf16.mxu0 0
        %1463 = vmatpush1.bf16.msra.mxu0 0
        %1464 = vmatprep.subr.bf16.mxu0 0
        %1465 = vmatpush1.bf16.msra.mxu0 0
        %1466 = vmatprep.subr.bf16.mxu0 0
        %1467 = vmatpush1.bf16.msra.mxu0 0
        %1468 = vmatprep.mubr.bf16.mxu0 0
        %1469 = vmatmul.mubr.bf16.gmra.mrb[0].mxu0 %v1431
        %v1470 = vpop.f32.mrb[0].mxu0
        %v1471 = vadd.f32 0.0, %v1470
        %v1472 = vpop.f32.mrb[0].mxu0
        %v1473 = vpop.f32.mrb[0].mxu0
        %v1474 = vpop.f32.mrb[0].mxu0
        %1475 = vdwg.mxu0
        %1477 = vrot.lane.b32.xlu0 %v1471, 24
        %v1478 = vpop.permute.xlu0 %1477
        %1480 = vst.msk [vmem:[#allocation2 + $0x8] sm:$0xff] %vm1006, %v1478
        %s1481 = scalar_lea.vmem %s459, 32 [#allocation5]
        %1482 = vst.msk [vmem:[%s1481] sm:$0xff] %vm550, %v1084
        %1483 = vst.msk [vmem:[%s1481 + $0x8] sm:$0xff] %vm550, %v1196
        %1484 = vst.msk [vmem:[%s1481 + $0x10] sm:$0xff] %vm550, %v1311
        %1485 = vst.msk [vmem:[%s1481 + $0x18] sm:$0xff] %vm550, %v1426
        %v1486 = vld [vmem:[#allocation2] sm:$0xff]
        %v1487 = vld [vmem:[#allocation2 + $0x8] sm:$0xff]
        %v1488 = vadd.f32 %v474, %v1486
        %v1489 = vadd.f32 %v475, %v1487
        %v1490 = vld [vmem:[%s4] sm:$0x1]
        %v1491 = vld [vmem:[%s5] sm:$0x1]
        %v1492 = vsel %vm490, %v1488, 0.0
        %1493 = vadd.xlane.f32.xlu0 %v1492
        %v1494 = vpop.xlane.xlu0 %1493
        %v1495 = vsel %vm490, %v1489, 0.0
        %1496 = vadd.xlane.f32.xlu0 %v1495
        %v1497 = vpop.xlane.xlu0 %1496
        %v1498 = vrcp.pop 32.0
        %v1499 = vmul.f32 %v1494, %v1498
        %v1500 = vmul.f32 %v1497, %v1498
        %v1501 = vsub.f32 %v1488, %v1499
        %v1502 = vsub.f32 %v1489, %v1500
        %v1503 = vmul.f32 %v1501, %v1501
        %v1504 = vmul.f32 %v1502, %v1502
        %v1505 = vsel %vm490, %v1503, 0.0
        %1506 = vadd.xlane.f32.xlu0 %v1505
        %v1507 = vpop.xlane.xlu0 %1506
        %v1508 = vsel %vm490, %v1504, 0.0
        %1509 = vadd.xlane.f32.xlu0 %v1508
        %v1510 = vpop.xlane.xlu0 %1509
        %v1511 = vmul.f32 %v1507, %v1498
        %v1512 = vmul.f32 %v1510, %v1498
        %v1513 = vadd.f32 %v1511, 1e-05
        %v1514 = vadd.f32 %v1512, 1e-05
        %v1515 = vrsqrt.pop %v1513
        %v1516 = vrsqrt.pop %v1514
        %v1517 = vmul.f32 %v1501, %v1515
        %v1518 = vmul.f32 %v1502, %v1516
        %v1520 = vlaneseq
        %v1521 = vshrl.u32 %v1520, 7
        %v1522 = vsub.s32 0, %v1521
        %v1523 = vrot.slane %v1490, %v1522
        %v1525 = vmul.f32 %v1517, %v1523
        %v1526 = vmul.f32 %v1518, %v1523
        %v1528 = vlaneseq
        %v1529 = vshrl.u32 %v1528, 7
        %v1530 = vsub.s32 0, %v1529
        %v1531 = vrot.slane %v1491, %v1530
        %v1533 = vadd.f32 %v1525, %v1531
        %v1534 = vadd.f32 %v1526, %v1531
        %v1535 = vpack.c.bf16 %v1534, %v1533
        %v1536 = vld [vmem:[%s6] sm:$0xff]
        %v1537 = vld [vmem:[%s6 + $0x8] sm:$0xff]
        %v1538 = vld [vmem:[%s6 + $0x10] sm:$0xff]
        %v1539 = vld [vmem:[%s6 + $0x18] sm:$0xff]
        %v1540 = vpack.c.bf16 %v1537, %v1536
        %v1541 = vpack.c.bf16 %v1539, %v1538
        %v1542 = vld [vmem:[%s7] sm:$0x1]
        %v1544 = vlaneseq
        %v1545 = vshrl.u32 %v1544, 7
        %v1546 = vsub.s32 0, %v1545
        %v1547 = vrot.slane %v1542, %v1546
        %v1550 = vsel %vm490, %v1535, 0
        %1552 = vmatprep.subr.bf16.mxu0 0
        %1553 = vmatpush1.bf16.msra.mxu0 %v1540
        %1554 = vmatprep.subr.bf16.mxu0 0
        %1555 = vmatpush1.bf16.msra.mxu0 %v1541
        %1556 = vmatprep.subr.bf16.mxu0 0
        %1557 = vmatpush1.bf16.msra.mxu0 0
        %1558 = vmatprep.subr.bf16.mxu0 0
        %1559 = vmatpush1.bf16.msra.mxu0 0
        %1560 = vmatprep.subr.bf16.mxu0 0
        %1561 = vmatpush1.bf16.msra.mxu0 0
        %1562 = vmatprep.subr.bf16.mxu0 0
        %1563 = vmatpush1.bf16.msra.mxu0 0
        %1564 = vmatprep.subr.bf16.mxu0 0
        %1565 = vmatpush1.bf16.msra.mxu0 0
        %1566 = vmatprep.subr.bf16.mxu0 0
        %1567 = vmatpush1.bf16.msra.mxu0 0
        %1568 = vmatprep.subr.bf16.mxu0 0
        %1569 = vmatpush1.bf16.msra.mxu0 0
        %1570 = vmatprep.subr.bf16.mxu0 0
        %1571 = vmatpush1.bf16.msra.mxu0 0
        %1572 = vmatprep.subr.bf16.mxu0 0
        %1573 = vmatpush1.bf16.msra.mxu0 0
        %1574 = vmatprep.subr.bf16.mxu0 0
        %1575 = vmatpush1.bf16.msra.mxu0 0
        %1576 = vmatprep.subr.bf16.mxu0 0
        %1577 = vmatpush1.bf16.msra.mxu0 0
        %1578 = vmatprep.subr.bf16.mxu0 0
        %1579 = vmatpush1.bf16.msra.mxu0 0
        %1580 = vmatprep.subr.bf16.mxu0 0
        %1581 = vmatpush1.bf16.msra.mxu0 0
        %1582 = vmatprep.subr.bf16.mxu0 0
        %1583 = vmatpush1.bf16.msra.mxu0 0
        %1584 = vmatprep.mubr.bf16.mxu0 0
        %1585 = vmatmul.mubr.bf16.gmra.mrb[0].mxu0 %v1550
        %v1586 = vpop.f32.mrb[0].mxu0
        %v1587 = vadd.f32 %v1547, %v1586
        %v1588 = vpop.f32.mrb[0].mxu0
        %v1589 = vpop.f32.mrb[0].mxu0
        %v1590 = vadd.f32 %v1547, %v1589
        %v1591 = vpop.f32.mrb[0].mxu0
        %1592 = vdwg.mxu0
        %v1593 = vmax.f32 %v1587, 0.0
        %v1594 = vmax.f32 %v1590, 0.0
        %v1595 = vpack.c.bf16 %v1594, %v1593
        %v1596 = vld [vmem:[%s8] sm:$0xff]
        %v1597 = vld [vmem:[%s8 + $0x8] sm:$0xff]
        %v1598 = vld [vmem:[%s8 + $0x10] sm:$0xff]
        %v1599 = vld [vmem:[%s8 + $0x18] sm:$0xff]
        %v1600 = vld [vmem:[%s8 + $0x20] sm:$0xff]
        %v1601 = vld [vmem:[%s8 + $0x28] sm:$0xff]
        %v1602 = vld [vmem:[%s8 + $0x30] sm:$0xff]
        %v1603 = vld [vmem:[%s8 + $0x38] sm:$0xff]
        %v1604 = vld [vmem:[%s8 + $0x40] sm:$0xff]
        %v1605 = vld [vmem:[%s8 + $0x48] sm:$0xff]
        %v1606 = vld [vmem:[%s8 + $0x50] sm:$0xff]
        %v1607 = vld [vmem:[%s8 + $0x58] sm:$0xff]
        %v1608 = vld [vmem:[%s8 + $0x60] sm:$0xff]
        %v1609 = vld [vmem:[%s8 + $0x68] sm:$0xff]
        %v1610 = vld [vmem:[%s8 + $0x70] sm:$0xff]
        %v1611 = vld [vmem:[%s8 + $0x78] sm:$0xff]
        %v1612 = vpack.c.bf16 %v1597, %v1596
        %v1613 = vpack.c.bf16 %v1599, %v1598
        %v1614 = vpack.c.bf16 %v1601, %v1600
        %v1615 = vpack.c.bf16 %v1603, %v1602
        %v1616 = vpack.c.bf16 %v1605, %v1604
        %v1617 = vpack.c.bf16 %v1607, %v1606
        %v1618 = vpack.c.bf16 %v1609, %v1608
        %v1619 = vpack.c.bf16 %v1611, %v1610
        %v1620 = vld [vmem:[%s9] sm:$0x1]
        %v1622 = vlaneseq
        %v1623 = vshrl.u32 %v1622, 7
        %v1624 = vsub.s32 0, %v1623
        %v1625 = vrot.slane %v1620, %v1624
        %1627 = vmatprep.subr.bf16.mxu0 0
        %1628 = vmatpush1.bf16.msra.mxu0 %v1612
        %1629 = vmatprep.subr.bf16.mxu0 0
        %1630 = vmatpush1.bf16.msra.mxu0 %v1613
        %1631 = vmatprep.subr.bf16.mxu0 0
        %1632 = vmatpush1.bf16.msra.mxu0 %v1614
        %1633 = vmatprep.subr.bf16.mxu0 0
        %1634 = vmatpush1.bf16.msra.mxu0 %v1615
        %1635 = vmatprep.subr.bf16.mxu0 0
        %1636 = vmatpush1.bf16.msra.mxu0 %v1616
        %1637 = vmatprep.subr.bf16.mxu0 0
        %1638 = vmatpush1.bf16.msra.mxu0 %v1617
        %1639 = vmatprep.subr.bf16.mxu0 0
        %1640 = vmatpush1.bf16.msra.mxu0 %v1618
        %1641 = vmatprep.subr.bf16.mxu0 0
        %1642 = vmatpush1.bf16.msra.mxu0 %v1619
        %1643 = vmatprep.subr.bf16.mxu0 0
        %1644 = vmatpush1.bf16.msra.mxu0 0
        %1645 = vmatprep.subr.bf16.mxu0 0
        %1646 = vmatpush1.bf16.msra.mxu0 0
        %1647 = vmatprep.subr.bf16.mxu0 0
        %1648 = vmatpush1.bf16.msra.mxu0 0
        %1649 = vmatprep.subr.bf16.mxu0 0
        %1650 = vmatpush1.bf16.msra.mxu0 0
        %1651 = vmatprep.subr.bf16.mxu0 0
        %1652 = vmatpush1.bf16.msra.mxu0 0
        %1653 = vmatprep.subr.bf16.mxu0 0
        %1654 = vmatpush1.bf16.msra.mxu0 0
        %1655 = vmatprep.subr.bf16.mxu0 0
        %1656 = vmatpush1.bf16.msra.mxu0 0
        %1657 = vmatprep.subr.bf16.mxu0 0
        %1658 = vmatpush1.bf16.msra.mxu0 0
        %1659 = vmatprep.mubr.bf16.mxu0 0
        %1660 = vmatmul.mubr.bf16.gmra.mrb[0].mxu0 %v1595
        %v1661 = vpop.f32.mrb[0].mxu0
        %v1662 = vadd.f32 %v1625, %v1661
        %v1663 = vpop.f32.mrb[0].mxu0
        %v1664 = vpop.f32.mrb[0].mxu0
        %v1665 = vadd.f32 %v1625, %v1664
        %v1666 = vpop.f32.mrb[0].mxu0
        %1667 = vdwg.mxu0
        %v1668 = vadd.f32 %v474, %v1662
        %v1669 = vadd.f32 %v475, %v1665
        %v1670 = vld [vmem:[%s10] sm:$0x1]
        %v1671 = vld [vmem:[%s11] sm:$0x1]
        %v1672 = vsel %vm490, %v1668, 0.0
        %1673 = vadd.xlane.f32.xlu0 %v1672
        %v1674 = vpop.xlane.xlu0 %1673
        %v1675 = vsel %vm490, %v1669, 0.0
        %1676 = vadd.xlane.f32.xlu0 %v1675
        %v1677 = vpop.xlane.xlu0 %1676
        %v1678 = vmul.f32 %v1674, %v1498
        %v1679 = vmul.f32 %v1677, %v1498
        %v1680 = vsub.f32 %v1668, %v1678
        %v1681 = vsub.f32 %v1669, %v1679
        %v1682 = vmul.f32 %v1680, %v1680
        %v1683 = vmul.f32 %v1681, %v1681
        %v1684 = vsel %vm490, %v1682, 0.0
        %1685 = vadd.xlane.f32.xlu0 %v1684
        %v1686 = vpop.xlane.xlu0 %1685
        %v1687 = vsel %vm490, %v1683, 0.0
        %1688 = vadd.xlane.f32.xlu0 %v1687
        %v1689 = vpop.xlane.xlu0 %1688
        %v1690 = vmul.f32 %v1686, %v1498
        %v1691 = vmul.f32 %v1689, %v1498
        %v1692 = vadd.f32 %v1690, 1e-05
        %v1693 = vadd.f32 %v1691, 1e-05
        %v1694 = vrsqrt.pop %v1692
        %v1695 = vrsqrt.pop %v1693
        %v1696 = vmul.f32 %v1680, %v1694
        %v1697 = vmul.f32 %v1681, %v1695
        %v1699 = vlaneseq
        %v1700 = vshrl.u32 %v1699, 7
        %v1701 = vsub.s32 0, %v1700
        %v1702 = vrot.slane %v1670, %v1701
        %v1704 = vmul.f32 %v1696, %v1702
        %v1705 = vmul.f32 %v1697, %v1702
        %v1707 = vlaneseq
        %v1708 = vshrl.u32 %v1707, 7
        %v1709 = vsub.s32 0, %v1708
        %v1710 = vrot.slane %v1671, %v1709
        %v1712 = vadd.f32 %v1704, %v1710
        %v1713 = vadd.f32 %v1705, %v1710
        %1714 = vst.msk [vmem:[%s452] sm:$0xff] %vm490, %v1712
        %1715 = vst.msk [vmem:[%s452 + $0x8] sm:$0xff] %vm490, %v1713
        %s1716 = sand.u32 %s301, 1
        %s1717 = scalar_lea.sflag [#allocation4], %s1716
        %s1718 = sand.u32 %s301, 1
        %s1719 = smul.addr %s1718, 16
        %s1720 = scalar_lea.vmem [#allocation3], %s1719
        %s1721 = sand.u32 %s327, 1
        %s1722 = scalar_lea.sflag [#allocation6], %s1721
        %s1723 = sand.u32 %s327, 1
        %s1724 = smul.addr %s1723, 64
        %s1725 = scalar_lea.vmem [#allocation5], %s1724
        // Predicated region
        $region69: #{tpu_custom_call.1} parent=67 // pred_check
          %p1726 = pneg %p311
        $region70: #{tpu_custom_call.1} parent=67 // pred_check_branch
          %1728 = sbr.rel (%p1726) target = $region72
        $region71: #{tpu_custom_call.1} parent=67 // pred_region
          %s1729 = smul.u32 2, %s31
          %s1731 = ssub.s32 256, 256
          %1732 = vsyncadd %s1717, %s1731
          %s1733 = smul.addr %s1729, 128
          %s1734 = scalar_lea.hbm %s12, %s1733
          %s1735 = sshll.u32 %s1720, 4
          %s1736 = int_to_ptr.vmem [resolvable:$true] %s1735
          %1741 = dma.vmem_to_hbm [thread:$0]  %s1736, 256, %s1734, %s1717, 128, 128, 8
        $region72: #{tpu_custom_call.1} parent=67 // pred_fallthru
          _
        // Predicated region
        $region73: #{tpu_custom_call.1} parent=67 // pred_check
          %p1742 = pneg %p337
        $region74: #{tpu_custom_call.1} parent=67 // pred_check_branch
          %1744 = sbr.rel (%p1742) target = $region76
        $region75: #{tpu_custom_call.1} parent=67 // pred_region
          %s1745 = smul.u32 2, %s31
          %s1747 = ssub.s32 1024, 1024
          %1748 = vsyncadd %s1722, %s1747
          %s1749 = smul.addr %s1745, 4
          %s1750 = smul.addr %s1749, 128
          %s1751 = scalar_lea.hbm %s13, %s1750
          %s1752 = sshll.u32 %s1725, 4
          %s1753 = int_to_ptr.vmem [resolvable:$true] %s1752
          %1758 = dma.vmem_to_hbm [thread:$0]  %s1753, 1024, %s1751, %s1722, 128, 128, 8
        $region76: #{tpu_custom_call.1} parent=67 // pred_fallthru
          _
      $region68: #{tpu_custom_call.1} parent=5 // pred_fallthru
        _
      %p1759 = scmp.le.s32.totalorder 2, %s26
      // Predicated region
      $region77: #{tpu_custom_call.1} parent=5 // pred_check
        %p1760 = pneg %p1759
      $region78: #{tpu_custom_call.1} parent=5 // pred_check_branch
        %1762 = sbr.rel (%p1760) target = $region80
      $region79: #{tpu_custom_call.1} parent=5 // pred_region
        %s1763 = ssub.s32 %s26, 2
        // Predicated region
        $region81: #{tpu_custom_call.1} parent=79 // pred_check
          %p1764 = pneg %p317
        $region82: #{tpu_custom_call.1} parent=79 // pred_check_branch
          %1766 = sbr.rel (%p1764) target = $region84
        $region83: #{tpu_custom_call.1} parent=79 // pred_region
          %s1767 = sand.u32 %s302, 1
          %s1768 = scalar_lea.sflag [#allocation4], %s1767
          %s1769 = sand.u32 %s302, 1
          %s1770 = smul.addr %s1769, 16
          %s1771 = scalar_lea.vmem [#allocation3], %s1770
          %1772 = dma.done %s1768, 256
        $region84: #{tpu_custom_call.1} parent=79 // pred_fallthru
          _
        // Predicated region
        $region85: #{tpu_custom_call.1} parent=79 // pred_check
          %p1773 = pneg %p343
        $region86: #{tpu_custom_call.1} parent=79 // pred_check_branch
          %1775 = sbr.rel (%p1773) target = $region88
        $region87: #{tpu_custom_call.1} parent=79 // pred_region
          %s1776 = sand.u32 %s328, 1
          %s1777 = scalar_lea.sflag [#allocation6], %s1776
          %s1778 = sand.u32 %s328, 1
          %s1779 = smul.addr %s1778, 64
          %s1780 = scalar_lea.vmem [#allocation5], %s1779
          %1781 = dma.done %s1777, 1024
        $region88: #{tpu_custom_call.1} parent=79 // pred_fallthru
          _
      $region80: #{tpu_custom_call.1} parent=5 // pred_fallthru
        _
    $region6: #{tpu_custom_call.1} parent=1 // loop_footer
      %s30 = sadd.s32 1, %s26
    $region7: #{tpu_custom_call.1} parent=1 // loop_footer_branch
      %25 = sbr.rel target = $region3
    $region8: #{tpu_custom_call.1} parent=1 // loop_exit
      _
    %1782 = vsyncpa [#allocation4], 1
    %s1783 = scalar_lea.sflag [#allocation4], 1
    %1784 = vsyncpa %s1783, 1
    %1785 = vsyncpa [#allocation6], 1
    %s1786 = scalar_lea.sflag [#allocation6], 1
    %1787 = vsyncpa %s1786, 1

</llo_original>
